<compile_context>
chip_gen: v6e
topology: v6e:2x2x1
jax: 0.10.0
libtpu: 0.0.40
codegen_flags: <defaults>
</compile_context>

<pallas_src>
import functools
import math

import jax
import jax.numpy as jnp
from jax.experimental import pallas as pl
from jax.experimental.pallas import tpu as pltpu

_LN_EPS = 1e-5
_INV_SQRT2 = 1.0 / math.sqrt(2.0)


# ----------------------------- helpers ------------------------------------- #

def _erf_poly(z):
    # Abramowitz & Stegun 7.1.26 rational approximation (|err| < 1.5e-7).
    # Uses only exp / mul / add, which lower cleanly in Mosaic.
    p = 0.3275911
    a1, a2, a3, a4, a5 = (0.254829592, -0.284496736, 1.421413741,
                          -1.453152027, 1.061405429)
    s = jnp.where(z >= 0.0, 1.0, -1.0)
    az = jnp.abs(z)
    t = 1.0 / (1.0 + p * az)
    poly = ((((a5 * t + a4) * t + a3) * t + a2) * t + a1) * t
    return s * (1.0 - poly * jnp.exp(-az * az))


def _gelu_exact(v):
    # nn.GELU() default = exact (erf-based) GELU.
    return 0.5 * v * (1.0 + _erf_poly(v * _INV_SQRT2))


# ----------------------------- Pallas kernel ------------------------------- #

def _transformer_block_kernel(
    x_ref, w_qkv_ref, w_out_ref, b_out_ref,
    w_ff1_ref, b_ff1_ref, w_ff2_ref, b_ff2_ref,
    ln1_g_ref, ln1_b_ref, ln2_g_ref, ln2_b_ref,
    o_ref, *, heads, dim_head, scale, prenorm):
    # x_ref: (1, N, D) block for one batch element.
    x = x_ref[0].astype(jnp.float32)                      # (N, D)
    inner = heads * dim_head

    def layer_norm(v, g_ref, b_ref):
        mu = jnp.mean(v, axis=-1, keepdims=True)
        c = v - mu
        var = jnp.mean(c * c, axis=-1, keepdims=True)     # biased, like PyTorch LN
        return c * jax.lax.rsqrt(var + _LN_EPS) * g_ref[...] + b_ref[...]

    # ------------------------- attention sub-block ------------------------- #
    xa = layer_norm(x, ln1_g_ref, ln1_b_ref) if prenorm else x
    qkv = jnp.dot(xa, w_qkv_ref[...],
                  preferred_element_type=jnp.float32)      # (N, 3*inner), VMEM value
    w_out = w_out_ref[...]                                 # (inner, D)

    # residual + out-projection bias; per-head projected outputs accumulate here
    res = x + b_out_ref[...]
    for h in range(heads):                                 # static unroll over heads
        lo = h * dim_head
        hi = lo + dim_head
        q = qkv[:, lo:hi] * scale                          # scale folded into q
        k = qkv[:, inner + lo:inner + hi]
        v = qkv[:, 2 * inner + lo:2 * inner + hi]
        dots = jnp.dot(q, k.T, preferred_element_type=jnp.float32)   # (N, N)
        m = jnp.max(dots, axis=-1, keepdims=True)
        e = jnp.exp(dots - m)
        p = e * pl.reciprocal(jnp.sum(e, axis=-1, keepdims=True), approx=False)
        head_out = jnp.dot(p, v, preferred_element_type=jnp.float32)  # (N, dd)
        # merged-head @ W_out decomposed per head (sublane-aligned row slice of W_out)
        res = res + jnp.dot(head_out, w_out[lo:hi, :],
                            preferred_element_type=jnp.float32)
    x1 = res                                               # residual 1 done

    # ------------------------ feed-forward sub-block ----------------------- #
    xf = layer_norm(x1, ln2_g_ref, ln2_b_ref) if prenorm else x1
    h1 = jnp.dot(xf, w_ff1_ref[...],
                 preferred_element_type=jnp.float32) + b_ff1_ref[...]
    h1 = _gelu_exact(h1)
    h2 = jnp.dot(h1, w_ff2_ref[...],
                 preferred_element_type=jnp.float32) + b_ff2_ref[...]

    o_ref[0] = (x1 + h2).astype(o_ref.dtype)               # residual 2


# ------------------------------- wrapper ----------------------------------- #

def transformer_block_forward(x, params, *, heads, dim_head, prenorm=False):
    B, N, D = x.shape
    inner = heads * dim_head
    mlp = params["w_ff1"].shape[1]
    scale = float(dim_head) ** (-0.5)

    row = lambda a: a.reshape(1, -1)     # biases / LN params as (1, C)

    kernel = functools.partial(
        _transformer_block_kernel,
        heads=heads, dim_head=dim_head, scale=scale, prenorm=prenorm)

    const2d = lambda shape: pl.BlockSpec(shape, lambda b: (0, 0))

    return pl.pallas_call(
        kernel,
        out_shape=jax.ShapeDtypeStruct((B, N, D), x.dtype),
        grid=(B,),
        in_specs=[
            pl.BlockSpec((1, N, D), lambda b: (b, 0, 0)),   # x
            const2d((D, 3 * inner)),                        # w_qkv
            const2d((inner, D)),                            # w_out
            const2d((1, D)),                                # b_out
            const2d((D, mlp)),                              # w_ff1
            const2d((1, mlp)),                              # b_ff1
            const2d((mlp, D)),                              # w_ff2
            const2d((1, D)),                                # b_ff2
            const2d((1, D)),                                # ln1_gamma (unused if not prenorm)
            const2d((1, D)),                                # ln1_beta
            const2d((1, D)),                                # ln2_gamma
            const2d((1, D)),                                # ln2_beta
        ],
        out_specs=pl.BlockSpec((1, N, D), lambda b: (b, 0, 0)),
        compiler_params=pltpu.CompilerParams(
            dimension_semantics=("parallel",)),
    )(
        x,
        params["w_qkv"], params["w_out"], row(params["b_out"]),
        params["w_ff1"], row(params["b_ff1"]),
        params["w_ff2"], row(params["b_ff2"]),
        row(params["ln1_g"]), row(params["ln1_b"]),
        row(params["ln2_g"]), row(params["ln2_b"]),
    )


# ------------------------- pure-JAX reference ------------------------------ #

def transformer_block_reference(x, params, *, heads, dim_head, prenorm=False):
    B, N, D = x.shape
    inner = heads * dim_head
    scale = float(dim_head) ** (-0.5)

    def ln(v, g, b):
        mu = v.mean(-1, keepdims=True)
        var = ((v - mu) ** 2).mean(-1, keepdims=True)
        return (v - mu) / jnp.sqrt(var + _LN_EPS) * g + b

    def attention(v_in):
        qkv = v_in @ params["w_qkv"]
        q, k, v = jnp.split(qkv, 3, axis=-1)
        to_heads = lambda t: t.reshape(B, N, heads, dim_head).transpose(0, 2, 1, 3)
        q, k, v = map(to_heads, (q, k, v))
        dots = jnp.einsum("bhqd,bhkd->bhqk", q, k) * scale
        attn = jax.nn.softmax(dots, axis=-1)
        out = jnp.einsum("bhqk,bhkd->bhqd", attn, v)
        out = out.transpose(0, 2, 1, 3).reshape(B, N, inner)
        return out @ params["w_out"] + params["b_out"]

    def ffn(v_in):
        h = jax.nn.gelu(v_in @ params["w_ff1"] + params["b_ff1"], approximate=False)
        return h @ params["w_ff2"] + params["b_ff2"]

    if prenorm:
        x = attention(ln(x, params["ln1_g"], params["ln1_b"])) + x
        x = ffn(ln(x, params["ln2_g"], params["ln2_b"])) + x
    else:
        x = attention(x) + x
        x = ffn(x) + x
    return x


# --------------------------------- main ------------------------------------ #

if __name__ == "__main__":
    B, N = 2, 8              # batch, sequence length
    dim = 32                 # model dim
    heads, dim_head = 4, 8   # inner_dim = 32, project_out = True
    mlp_dim = 64

    key = jax.random.PRNGKey(0)
    ks = jax.random.split(key, 12)

    x = jax.random.normal(ks[0], (B, N, dim), dtype=jnp.float32)
    params = dict(
        w_qkv=jax.random.normal(ks[1], (dim, heads * dim_head * 3), jnp.float32) * 0.05,
        w_out=jax.random.normal(ks[2], (heads * dim_head, dim), jnp.float32) * 0.05,
        b_out=jax.random.normal(ks[3], (dim,), jnp.float32) * 0.05,
        w_ff1=jax.random.normal(ks[4], (dim, mlp_dim), jnp.float32) * 0.05,
        b_ff1=jax.random.normal(ks[5], (mlp_dim,), jnp.float32) * 0.05,
        w_ff2=jax.random.normal(ks[6], (mlp_dim, dim), jnp.float32) * 0.05,
        b_ff2=jax.random.normal(ks[7], (dim,), jnp.float32) * 0.05,
        ln1_g=1.0 + 0.1 * jax.random.normal(ks[8], (dim,), jnp.float32),
        ln1_b=0.1 * jax.random.normal(ks[9], (dim,), jnp.float32),
        ln2_g=1.0 + 0.1 * jax.random.normal(ks[10], (dim,), jnp.float32),
        ln2_b=0.1 * jax.random.normal(ks[11], (dim,), jnp.float32),
    )

    for prenorm in (False, True):    # module default is prenorm=False
        y = transformer_block_forward(x, params, heads=heads, dim_head=dim_head,
                                      prenorm=prenorm)
        y = jax.block_until_ready(y)
        y_ref = transformer_block_reference(x, params, heads=heads,
                                            dim_head=dim_head, prenorm=prenorm)
        assert y.shape == (B, N, dim)
        assert jnp.allclose(y, y_ref, atol=1e-5, rtol=1e-5), \
            f"mismatch vs reference (prenorm={prenorm})"

    print("KERNEL_OK")
</pallas_src>

<mosaic_0001>
module attributes {stable_mosaic.version = 11 : i64} {
  func.func @_transformer_block_kernel(%arg0: i32, %arg1: memref<1x8x32xf32, #tpu.memory_space<vmem>>, %arg2: memref<32x96xf32, #tpu.memory_space<vmem>>, %arg3: memref<32x32xf32, #tpu.memory_space<vmem>>, %arg4: memref<1x32xf32, #tpu.memory_space<vmem>>, %arg5: memref<32x64xf32, #tpu.memory_space<vmem>>, %arg6: memref<1x64xf32, #tpu.memory_space<vmem>>, %arg7: memref<64x32xf32, #tpu.memory_space<vmem>>, %arg8: memref<1x32xf32, #tpu.memory_space<vmem>>, %arg9: memref<1x32xf32, #tpu.memory_space<vmem>>, %arg10: memref<1x32xf32, #tpu.memory_space<vmem>>, %arg11: memref<1x32xf32, #tpu.memory_space<vmem>>, %arg12: memref<1x32xf32, #tpu.memory_space<vmem>>, %arg13: memref<1x8x32xf32, #tpu.memory_space<vmem>>) attributes {dimension_semantics = [#tpu.dimension_semantics<parallel>], iteration_bounds = array<i64: 2>, scalar_prefetch = 0 : i64, scratch_operands = 0 : i64, tpu.core_type = #tpu.core_type<tc>, window_params = [{transform_indices = @transform_0, window_bounds = array<i64: 1, 8, 32>}, {pipeline_mode = #tpu.pipeline_mode<synchronous>, transform_indices = @transform_1, window_bounds = array<i64: 32, 96>}, {pipeline_mode = #tpu.pipeline_mode<synchronous>, transform_indices = @transform_2, window_bounds = array<i64: 32, 32>}, {pipeline_mode = #tpu.pipeline_mode<synchronous>, transform_indices = @transform_3, window_bounds = array<i64: 1, 32>}, {pipeline_mode = #tpu.pipeline_mode<synchronous>, transform_indices = @transform_4, window_bounds = array<i64: 32, 64>}, {pipeline_mode = #tpu.pipeline_mode<synchronous>, transform_indices = @transform_5, window_bounds = array<i64: 1, 64>}, {pipeline_mode = #tpu.pipeline_mode<synchronous>, transform_indices = @transform_6, window_bounds = array<i64: 64, 32>}, {pipeline_mode = #tpu.pipeline_mode<synchronous>, transform_indices = @transform_7, window_bounds = array<i64: 1, 32>}, {pipeline_mode = #tpu.pipeline_mode<synchronous>, transform_indices = @transform_8, window_bounds = array<i64: 1, 32>}, {pipeline_mode = #tpu.pipeline_mode<synchronous>, transform_indices = @transform_9, window_bounds = array<i64: 1, 32>}, {pipeline_mode = #tpu.pipeline_mode<synchronous>, transform_indices = @transform_10, window_bounds = array<i64: 1, 32>}, {pipeline_mode = #tpu.pipeline_mode<synchronous>, transform_indices = @transform_11, window_bounds = array<i64: 1, 32>}, {transform_indices = @transform_12, window_bounds = array<i64: 1, 8, 32>}]} {
    %c0 = arith.constant 0 : index
    %c0_0 = arith.constant 0 : index
    %c0_1 = arith.constant 0 : index
    %0 = vector.load %arg1[%c0, %c0_0, %c0_1] : memref<1x8x32xf32, #tpu.memory_space<vmem>>, vector<1x8x32xf32>
    %1 = vector.shape_cast %0 : vector<1x8x32xf32> to vector<8x32xf32>
    %c0_2 = arith.constant 0 : index
    %c0_3 = arith.constant 0 : index
    %2 = vector.load %arg2[%c0_2, %c0_3] : memref<32x96xf32, #tpu.memory_space<vmem>>, vector<32x96xf32>
    %cst = arith.constant dense<0.000000e+00> : vector<8x96xf32>
    %3 = tpu.matmul %1, %2, %cst {dimension_numbers = #tpu.dot_dimension_numbers<[1], [0], [0], [1], [0, 0, 1, 1], [], []>} : vector<8x32xf32>, vector<32x96xf32>, vector<8x96xf32> -> vector<8x96xf32>
    %c0_4 = arith.constant 0 : index
    %c0_5 = arith.constant 0 : index
    %4 = vector.load %arg3[%c0_4, %c0_5] : memref<32x32xf32, #tpu.memory_space<vmem>>, vector<32x32xf32>
    %c0_6 = arith.constant 0 : index
    %c0_7 = arith.constant 0 : index
    %5 = vector.load %arg4[%c0_6, %c0_7] : memref<1x32xf32, #tpu.memory_space<vmem>>, vector<1x32xf32>
    %6 = vector.broadcast %5 : vector<1x32xf32> to vector<8x32xf32>
    %7 = arith.addf %1, %6 : vector<8x32xf32>
    %8 = vector.extract_strided_slice %3 {offsets = [0, 0], sizes = [8, 8], strides = [1, 1]} : vector<8x96xf32> to vector<8x8xf32>
    %cst_8 = arith.constant 0.353553385 : f32
    %9 = vector.broadcast %cst_8 : f32 to vector<8x8xf32>
    %10 = arith.mulf %8, %9 : vector<8x8xf32>
    %11 = vector.extract_strided_slice %3 {offsets = [0, 32], sizes = [8, 8], strides = [1, 1]} : vector<8x96xf32> to vector<8x8xf32>
    %12 = vector.extract_strided_slice %3 {offsets = [0, 64], sizes = [8, 8], strides = [1, 1]} : vector<8x96xf32> to vector<8x8xf32>
    %13 = tpu.transpose %11, [1, 0] : vector<8x8xf32> -> vector<8x8xf32>
    %cst_9 = arith.constant dense<0.000000e+00> : vector<8x8xf32>
    %14 = tpu.matmul %10, %13, %cst_9 {dimension_numbers = #tpu.dot_dimension_numbers<[1], [0], [0], [1], [0, 0, 1, 1], [], []>} : vector<8x8xf32>, vector<8x8xf32>, vector<8x8xf32> -> vector<8x8xf32>
    %cst_10 = arith.constant dense<0xFF800000> : vector<8xf32>
    %15 = vector.multi_reduction <maximumf>, %14, %cst_10 [1] : vector<8x8xf32> to vector<8xf32>
    %16 = vector.shape_cast %15 : vector<8xf32> to vector<8x1xf32>
    %17 = vector.broadcast %16 : vector<8x1xf32> to vector<8x8xf32>
    %18 = arith.subf %14, %17 : vector<8x8xf32>
    %19 = math.exp %18 : vector<8x8xf32>
    %cst_11 = arith.constant dense<0.000000e+00> : vector<8xf32>
    %20 = vector.multi_reduction <add>, %19, %cst_11 [1] : vector<8x8xf32> to vector<8xf32>
    %21 = vector.shape_cast %20 : vector<8xf32> to vector<8x1xf32>
    %22 = tpu.reciprocal %21 : vector<8x1xf32> -> vector<8x1xf32>
    %23 = vector.broadcast %22 : vector<8x1xf32> to vector<8x8xf32>
    %24 = arith.mulf %19, %23 : vector<8x8xf32>
    %cst_12 = arith.constant dense<0.000000e+00> : vector<8x8xf32>
    %25 = tpu.matmul %24, %12, %cst_12 {dimension_numbers = #tpu.dot_dimension_numbers<[1], [0], [0], [1], [0, 0, 1, 1], [], []>} : vector<8x8xf32>, vector<8x8xf32>, vector<8x8xf32> -> vector<8x8xf32>
    %26 = vector.extract_strided_slice %4 {offsets = [0, 0], sizes = [8, 32], strides = [1, 1]} : vector<32x32xf32> to vector<8x32xf32>
    %cst_13 = arith.constant dense<0.000000e+00> : vector<8x32xf32>
    %27 = tpu.matmul %25, %26, %cst_13 {dimension_numbers = #tpu.dot_dimension_numbers<[1], [0], [0], [1], [0, 0, 1, 1], [], []>} : vector<8x8xf32>, vector<8x32xf32>, vector<8x32xf32> -> vector<8x32xf32>
    %28 = arith.addf %7, %27 : vector<8x32xf32>
    %29 = vector.extract_strided_slice %3 {offsets = [0, 8], sizes = [8, 8], strides = [1, 1]} : vector<8x96xf32> to vector<8x8xf32>
    %cst_14 = arith.constant 0.353553385 : f32
    %30 = vector.broadcast %cst_14 : f32 to vector<8x8xf32>
    %31 = arith.mulf %29, %30 : vector<8x8xf32>
    %32 = vector.extract_strided_slice %3 {offsets = [0, 40], sizes = [8, 8], strides = [1, 1]} : vector<8x96xf32> to vector<8x8xf32>
    %33 = vector.extract_strided_slice %3 {offsets = [0, 72], sizes = [8, 8], strides = [1, 1]} : vector<8x96xf32> to vector<8x8xf32>
    %34 = tpu.transpose %32, [1, 0] : vector<8x8xf32> -> vector<8x8xf32>
    %cst_15 = arith.constant dense<0.000000e+00> : vector<8x8xf32>
    %35 = tpu.matmul %31, %34, %cst_15 {dimension_numbers = #tpu.dot_dimension_numbers<[1], [0], [0], [1], [0, 0, 1, 1], [], []>} : vector<8x8xf32>, vector<8x8xf32>, vector<8x8xf32> -> vector<8x8xf32>
    %cst_16 = arith.constant dense<0xFF800000> : vector<8xf32>
    %36 = vector.multi_reduction <maximumf>, %35, %cst_16 [1] : vector<8x8xf32> to vector<8xf32>
    %37 = vector.shape_cast %36 : vector<8xf32> to vector<8x1xf32>
    %38 = vector.broadcast %37 : vector<8x1xf32> to vector<8x8xf32>
    %39 = arith.subf %35, %38 : vector<8x8xf32>
    %40 = math.exp %39 : vector<8x8xf32>
    %cst_17 = arith.constant dense<0.000000e+00> : vector<8xf32>
    %41 = vector.multi_reduction <add>, %40, %cst_17 [1] : vector<8x8xf32> to vector<8xf32>
    %42 = vector.shape_cast %41 : vector<8xf32> to vector<8x1xf32>
    %43 = tpu.reciprocal %42 : vector<8x1xf32> -> vector<8x1xf32>
    %44 = vector.broadcast %43 : vector<8x1xf32> to vector<8x8xf32>
    %45 = arith.mulf %40, %44 : vector<8x8xf32>
    %cst_18 = arith.constant dense<0.000000e+00> : vector<8x8xf32>
    %46 = tpu.matmul %45, %33, %cst_18 {dimension_numbers = #tpu.dot_dimension_numbers<[1], [0], [0], [1], [0, 0, 1, 1], [], []>} : vector<8x8xf32>, vector<8x8xf32>, vector<8x8xf32> -> vector<8x8xf32>
    %47 = vector.extract_strided_slice %4 {offsets = [8, 0], sizes = [8, 32], strides = [1, 1]} : vector<32x32xf32> to vector<8x32xf32>
    %cst_19 = arith.constant dense<0.000000e+00> : vector<8x32xf32>
    %48 = tpu.matmul %46, %47, %cst_19 {dimension_numbers = #tpu.dot_dimension_numbers<[1], [0], [0], [1], [0, 0, 1, 1], [], []>} : vector<8x8xf32>, vector<8x32xf32>, vector<8x32xf32> -> vector<8x32xf32>
    %49 = arith.addf %28, %48 : vector<8x32xf32>
    %50 = vector.extract_strided_slice %3 {offsets = [0, 16], sizes = [8, 8], strides = [1, 1]} : vector<8x96xf32> to vector<8x8xf32>
    %cst_20 = arith.constant 0.353553385 : f32
    %51 = vector.broadcast %cst_20 : f32 to vector<8x8xf32>
    %52 = arith.mulf %50, %51 : vector<8x8xf32>
    %53 = vector.extract_strided_slice %3 {offsets = [0, 48], sizes = [8, 8], strides = [1, 1]} : vector<8x96xf32> to vector<8x8xf32>
    %54 = vector.extract_strided_slice %3 {offsets = [0, 80], sizes = [8, 8], strides = [1, 1]} : vector<8x96xf32> to vector<8x8xf32>
    %55 = tpu.transpose %53, [1, 0] : vector<8x8xf32> -> vector<8x8xf32>
    %cst_21 = arith.constant dense<0.000000e+00> : vector<8x8xf32>
    %56 = tpu.matmul %52, %55, %cst_21 {dimension_numbers = #tpu.dot_dimension_numbers<[1], [0], [0], [1], [0, 0, 1, 1], [], []>} : vector<8x8xf32>, vector<8x8xf32>, vector<8x8xf32> -> vector<8x8xf32>
    %cst_22 = arith.constant dense<0xFF800000> : vector<8xf32>
    %57 = vector.multi_reduction <maximumf>, %56, %cst_22 [1] : vector<8x8xf32> to vector<8xf32>
    %58 = vector.shape_cast %57 : vector<8xf32> to vector<8x1xf32>
    %59 = vector.broadcast %58 : vector<8x1xf32> to vector<8x8xf32>
    %60 = arith.subf %56, %59 : vector<8x8xf32>
    %61 = math.exp %60 : vector<8x8xf32>
    %cst_23 = arith.constant dense<0.000000e+00> : vector<8xf32>
    %62 = vector.multi_reduction <add>, %61, %cst_23 [1] : vector<8x8xf32> to vector<8xf32>
    %63 = vector.shape_cast %62 : vector<8xf32> to vector<8x1xf32>
    %64 = tpu.reciprocal %63 : vector<8x1xf32> -> vector<8x1xf32>
    %65 = vector.broadcast %64 : vector<8x1xf32> to vector<8x8xf32>
    %66 = arith.mulf %61, %65 : vector<8x8xf32>
    %cst_24 = arith.constant dense<0.000000e+00> : vector<8x8xf32>
    %67 = tpu.matmul %66, %54, %cst_24 {dimension_numbers = #tpu.dot_dimension_numbers<[1], [0], [0], [1], [0, 0, 1, 1], [], []>} : vector<8x8xf32>, vector<8x8xf32>, vector<8x8xf32> -> vector<8x8xf32>
    %68 = vector.extract_strided_slice %4 {offsets = [16, 0], sizes = [8, 32], strides = [1, 1]} : vector<32x32xf32> to vector<8x32xf32>
    %cst_25 = arith.constant dense<0.000000e+00> : vector<8x32xf32>
    %69 = tpu.matmul %67, %68, %cst_25 {dimension_numbers = #tpu.dot_dimension_numbers<[1], [0], [0], [1], [0, 0, 1, 1], [], []>} : vector<8x8xf32>, vector<8x32xf32>, vector<8x32xf32> -> vector<8x32xf32>
    %70 = arith.addf %49, %69 : vector<8x32xf32>
    %71 = vector.extract_strided_slice %3 {offsets = [0, 24], sizes = [8, 8], strides = [1, 1]} : vector<8x96xf32> to vector<8x8xf32>
    %cst_26 = arith.constant 0.353553385 : f32
    %72 = vector.broadcast %cst_26 : f32 to vector<8x8xf32>
    %73 = arith.mulf %71, %72 : vector<8x8xf32>
    %74 = vector.extract_strided_slice %3 {offsets = [0, 56], sizes = [8, 8], strides = [1, 1]} : vector<8x96xf32> to vector<8x8xf32>
    %75 = vector.extract_strided_slice %3 {offsets = [0, 88], sizes = [8, 8], strides = [1, 1]} : vector<8x96xf32> to vector<8x8xf32>
    %76 = tpu.transpose %74, [1, 0] : vector<8x8xf32> -> vector<8x8xf32>
    %cst_27 = arith.constant dense<0.000000e+00> : vector<8x8xf32>
    %77 = tpu.matmul %73, %76, %cst_27 {dimension_numbers = #tpu.dot_dimension_numbers<[1], [0], [0], [1], [0, 0, 1, 1], [], []>} : vector<8x8xf32>, vector<8x8xf32>, vector<8x8xf32> -> vector<8x8xf32>
    %cst_28 = arith.constant dense<0xFF800000> : vector<8xf32>
    %78 = vector.multi_reduction <maximumf>, %77, %cst_28 [1] : vector<8x8xf32> to vector<8xf32>
    %79 = vector.shape_cast %78 : vector<8xf32> to vector<8x1xf32>
    %80 = vector.broadcast %79 : vector<8x1xf32> to vector<8x8xf32>
    %81 = arith.subf %77, %80 : vector<8x8xf32>
    %82 = math.exp %81 : vector<8x8xf32>
    %cst_29 = arith.constant dense<0.000000e+00> : vector<8xf32>
    %83 = vector.multi_reduction <add>, %82, %cst_29 [1] : vector<8x8xf32> to vector<8xf32>
    %84 = vector.shape_cast %83 : vector<8xf32> to vector<8x1xf32>
    %85 = tpu.reciprocal %84 : vector<8x1xf32> -> vector<8x1xf32>
    %86 = vector.broadcast %85 : vector<8x1xf32> to vector<8x8xf32>
    %87 = arith.mulf %82, %86 : vector<8x8xf32>
    %cst_30 = arith.constant dense<0.000000e+00> : vector<8x8xf32>
    %88 = tpu.matmul %87, %75, %cst_30 {dimension_numbers = #tpu.dot_dimension_numbers<[1], [0], [0], [1], [0, 0, 1, 1], [], []>} : vector<8x8xf32>, vector<8x8xf32>, vector<8x8xf32> -> vector<8x8xf32>
    %89 = vector.extract_strided_slice %4 {offsets = [24, 0], sizes = [8, 32], strides = [1, 1]} : vector<32x32xf32> to vector<8x32xf32>
    %cst_31 = arith.constant dense<0.000000e+00> : vector<8x32xf32>
    %90 = tpu.matmul %88, %89, %cst_31 {dimension_numbers = #tpu.dot_dimension_numbers<[1], [0], [0], [1], [0, 0, 1, 1], [], []>} : vector<8x8xf32>, vector<8x32xf32>, vector<8x32xf32> -> vector<8x32xf32>
    %91 = arith.addf %70, %90 : vector<8x32xf32>
    %c0_32 = arith.constant 0 : index
    %c0_33 = arith.constant 0 : index
    %92 = vector.load %arg5[%c0_32, %c0_33] : memref<32x64xf32, #tpu.memory_space<vmem>>, vector<32x64xf32>
    %cst_34 = arith.constant dense<0.000000e+00> : vector<8x64xf32>
    %93 = tpu.matmul %91, %92, %cst_34 {dimension_numbers = #tpu.dot_dimension_numbers<[1], [0], [0], [1], [0, 0, 1, 1], [], []>} : vector<8x32xf32>, vector<32x64xf32>, vector<8x64xf32> -> vector<8x64xf32>
    %c0_35 = arith.constant 0 : index
    %c0_36 = arith.constant 0 : index
    %94 = vector.load %arg6[%c0_35, %c0_36] : memref<1x64xf32, #tpu.memory_space<vmem>>, vector<1x64xf32>
    %95 = vector.broadcast %94 : vector<1x64xf32> to vector<8x64xf32>
    %96 = arith.addf %93, %95 : vector<8x64xf32>
    %cst_37 = arith.constant 5.000000e-01 : f32
    %97 = vector.broadcast %cst_37 : f32 to vector<8x64xf32>
    %98 = arith.mulf %97, %96 : vector<8x64xf32>
    %cst_38 = arith.constant 0.707106769 : f32
    %99 = vector.broadcast %cst_38 : f32 to vector<8x64xf32>
    %100 = arith.mulf %96, %99 : vector<8x64xf32>
    %cst_39 = arith.constant 0.000000e+00 : f32
    %101 = vector.broadcast %cst_39 : f32 to vector<8x64xf32>
    %102 = arith.cmpf oge, %100, %101 : vector<8x64xf32>
    %cst_40 = arith.constant 1.000000e+00 : f32
    %cst_41 = arith.constant -1.000000e+00 : f32
    %103 = vector.broadcast %cst_40 : f32 to vector<8x64xf32>
    %104 = vector.broadcast %cst_41 : f32 to vector<8x64xf32>
    %105 = arith.select %102, %103, %104 : vector<8x64xi1>, vector<8x64xf32>
    %106 = math.absf %100 : vector<8x64xf32>
    %cst_42 = arith.constant 0.327591091 : f32
    %107 = vector.broadcast %cst_42 : f32 to vector<8x64xf32>
    %108 = arith.mulf %107, %106 : vector<8x64xf32>
    %cst_43 = arith.constant 1.000000e+00 : f32
    %109 = vector.broadcast %cst_43 : f32 to vector<8x64xf32>
    %110 = arith.addf %109, %108 : vector<8x64xf32>
    %cst_44 = arith.constant 1.000000e+00 : f32
    %111 = vector.broadcast %cst_44 : f32 to vector<8x64xf32>
    %112 = arith.divf %111, %110 : vector<8x64xf32>
    %cst_45 = arith.constant 1.06140542 : f32
    %113 = vector.broadcast %cst_45 : f32 to vector<8x64xf32>
    %114 = arith.mulf %113, %112 : vector<8x64xf32>
    %cst_46 = arith.constant -1.45315206 : f32
    %115 = vector.broadcast %cst_46 : f32 to vector<8x64xf32>
    %116 = arith.addf %114, %115 : vector<8x64xf32>
    %117 = arith.mulf %116, %112 : vector<8x64xf32>
    %cst_47 = arith.constant 1.42141378 : f32
    %118 = vector.broadcast %cst_47 : f32 to vector<8x64xf32>
    %119 = arith.addf %117, %118 : vector<8x64xf32>
    %120 = arith.mulf %119, %112 : vector<8x64xf32>
    %cst_48 = arith.constant -0.284496725 : f32
    %121 = vector.broadcast %cst_48 : f32 to vector<8x64xf32>
    %122 = arith.addf %120, %121 : vector<8x64xf32>
    %123 = arith.mulf %122, %112 : vector<8x64xf32>
    %cst_49 = arith.constant 0.254829586 : f32
    %124 = vector.broadcast %cst_49 : f32 to vector<8x64xf32>
    %125 = arith.addf %123, %124 : vector<8x64xf32>
    %126 = arith.mulf %125, %112 : vector<8x64xf32>
    %cst_50 = arith.constant 0.000000e+00 : f32
    %127 = vector.broadcast %cst_50 : f32 to vector<8x64xf32>
    %128 = arith.subf %127, %106 : vector<8x64xf32>
    %129 = arith.mulf %128, %106 : vector<8x64xf32>
    %130 = math.exp %129 : vector<8x64xf32>
    %131 = arith.mulf %126, %130 : vector<8x64xf32>
    %cst_51 = arith.constant 1.000000e+00 : f32
    %132 = vector.broadcast %cst_51 : f32 to vector<8x64xf32>
    %133 = arith.subf %132, %131 : vector<8x64xf32>
    %134 = arith.mulf %105, %133 : vector<8x64xf32>
    %cst_52 = arith.constant 1.000000e+00 : f32
    %135 = vector.broadcast %cst_52 : f32 to vector<8x64xf32>
    %136 = arith.addf %135, %134 : vector<8x64xf32>
    %137 = arith.mulf %98, %136 : vector<8x64xf32>
    %c0_53 = arith.constant 0 : index
    %c0_54 = arith.constant 0 : index
    %138 = vector.load %arg7[%c0_53, %c0_54] : memref<64x32xf32, #tpu.memory_space<vmem>>, vector<64x32xf32>
    %cst_55 = arith.constant dense<0.000000e+00> : vector<8x32xf32>
    %139 = tpu.matmul %137, %138, %cst_55 {dimension_numbers = #tpu.dot_dimension_numbers<[1], [0], [0], [1], [0, 0, 1, 1], [], []>} : vector<8x64xf32>, vector<64x32xf32>, vector<8x32xf32> -> vector<8x32xf32>
    %c0_56 = arith.constant 0 : index
    %c0_57 = arith.constant 0 : index
    %140 = vector.load %arg8[%c0_56, %c0_57] : memref<1x32xf32, #tpu.memory_space<vmem>>, vector<1x32xf32>
    %141 = vector.broadcast %140 : vector<1x32xf32> to vector<8x32xf32>
    %142 = arith.addf %139, %141 : vector<8x32xf32>
    %143 = arith.addf %91, %142 : vector<8x32xf32>
    %c0_58 = arith.constant 0 : index
    %c0_59 = arith.constant 0 : index
    %c0_60 = arith.constant 0 : index
    %144 = vector.load %arg13[%c0_58, %c0_59, %c0_60] : memref<1x8x32xf32, #tpu.memory_space<vmem>>, vector<1x8x32xf32>
    %145 = vector.shape_cast %144 : vector<1x8x32xf32> to vector<8x32xf32>
    %146 = vector.shape_cast %143 : vector<8x32xf32> to vector<1x8x32xf32>
    tpu.vector_store %arg13[%c0_58, %c0_59, %c0_60], %146 {strides = array<i32>} : memref<1x8x32xf32, #tpu.memory_space<vmem>>, vector<1x8x32xf32>,
    return
  }
  func.func @transform_0(%arg0: i32) -> (i32, i32, i32) {
    %c0_i32 = arith.constant 0 : i32
    %c0_i32_0 = arith.constant 0 : i32
    %c0_i32_1 = arith.constant 0 : i32
    return %arg0, %c0_i32, %c0_i32_0 : i32, i32, i32
  }
  func.func @transform_1(%arg0: i32) -> (i32, i32) {
    %c0_i32 = arith.constant 0 : i32
    %c0_i32_0 = arith.constant 0 : i32
    %c0_i32_1 = arith.constant 0 : i32
    return %c0_i32, %c0_i32_0 : i32, i32
  }
  func.func @transform_2(%arg0: i32) -> (i32, i32) {
    %c0_i32 = arith.constant 0 : i32
    %c0_i32_0 = arith.constant 0 : i32
    %c0_i32_1 = arith.constant 0 : i32
    return %c0_i32, %c0_i32_0 : i32, i32
  }
  func.func @transform_3(%arg0: i32) -> (i32, i32) {
    %c0_i32 = arith.constant 0 : i32
    %c0_i32_0 = arith.constant 0 : i32
    %c0_i32_1 = arith.constant 0 : i32
    return %c0_i32, %c0_i32_0 : i32, i32
  }
  func.func @transform_4(%arg0: i32) -> (i32, i32) {
    %c0_i32 = arith.constant 0 : i32
    %c0_i32_0 = arith.constant 0 : i32
    %c0_i32_1 = arith.constant 0 : i32
    return %c0_i32, %c0_i32_0 : i32, i32
  }
  func.func @transform_5(%arg0: i32) -> (i32, i32) {
    %c0_i32 = arith.constant 0 : i32
    %c0_i32_0 = arith.constant 0 : i32
    %c0_i32_1 = arith.constant 0 : i32
    return %c0_i32, %c0_i32_0 : i32, i32
  }
  func.func @transform_6(%arg0: i32) -> (i32, i32) {
    %c0_i32 = arith.constant 0 : i32
    %c0_i32_0 = arith.constant 0 : i32
    %c0_i32_1 = arith.constant 0 : i32
    return %c0_i32, %c0_i32_0 : i32, i32
  }
  func.func @transform_7(%arg0: i32) -> (i32, i32) {
    %c0_i32 = arith.constant 0 : i32
    %c0_i32_0 = arith.constant 0 : i32
    %c0_i32_1 = arith.constant 0 : i32
    return %c0_i32, %c0_i32_0 : i32, i32
  }
  func.func @transform_8(%arg0: i32) -> (i32, i32) {
    %c0_i32 = arith.constant 0 : i32
    %c0_i32_0 = arith.constant 0 : i32
    %c0_i32_1 = arith.constant 0 : i32
    return %c0_i32, %c0_i32_0 : i32, i32
  }
  func.func @transform_9(%arg0: i32) -> (i32, i32) {
    %c0_i32 = arith.constant 0 : i32
    %c0_i32_0 = arith.constant 0 : i32
    %c0_i32_1 = arith.constant 0 : i32
    return %c0_i32, %c0_i32_0 : i32, i32
  }
  func.func @transform_10(%arg0: i32) -> (i32, i32) {
    %c0_i32 = arith.constant 0 : i32
    %c0_i32_0 = arith.constant 0 : i32
    %c0_i32_1 = arith.constant 0 : i32
    return %c0_i32, %c0_i32_0 : i32, i32
  }
  func.func @transform_11(%arg0: i32) -> (i32, i32) {
    %c0_i32 = arith.constant 0 : i32
    %c0_i32_0 = arith.constant 0 : i32
    %c0_i32_1 = arith.constant 0 : i32
    return %c0_i32, %c0_i32_0 : i32, i32
  }
  func.func @transform_12(%arg0: i32) -> (i32, i32, i32) {
    %c0_i32 = arith.constant 0 : i32
    %c0_i32_0 = arith.constant 0 : i32
    %c0_i32_1 = arith.constant 0 : i32
    return %arg0, %c0_i32, %c0_i32_0 : i32, i32, i32
  }
}

</mosaic_0001>

<llo_original>
// kernel: tpu_custom_call.1
$region0: #{tpu_custom_call.1}
  #allocation0 [shape = 'u32[]', space=smem, size = 0x4, offset = 0x4, fixed_abs, tag = 'smem constant byte address 0x4 - core index']
  #allocation1 [shape = 'u32[144,128]{1,0:T(1,128)}', space=vmem, size = 0x12000, scoped, tag = 'internal scratch']
  %s0 = inlined_call_operand.hbm [shape: f32[2,8,32], index: 0, kind: input, shape index: {}]
  %s1 = inlined_call_operand.vmem [shape: f32[32,96], index: 1, kind: input, shape index: {}]
  %s2 = inlined_call_operand.vmem [shape: f32[32,32], index: 2, kind: input, shape index: {}]
  %s3 = inlined_call_operand.vmem [shape: f32[1,32], index: 3, kind: input, shape index: {}]
  %s4 = inlined_call_operand.vmem [shape: f32[32,64], index: 4, kind: input, shape index: {}]
  %s5 = inlined_call_operand.vmem [shape: f32[1,64], index: 5, kind: input, shape index: {}]
  %s6 = inlined_call_operand.vmem [shape: f32[64,32], index: 6, kind: input, shape index: {}]
  %s7 = inlined_call_operand.vmem [shape: f32[1,32], index: 7, kind: input, shape index: {}]
  %s8 = inlined_call_operand.vmem [shape: f32[1,32], index: 8, kind: input, shape index: {}]
  %s9 = inlined_call_operand.vmem [shape: f32[1,32], index: 9, kind: input, shape index: {}]
  %s10 = inlined_call_operand.vmem [shape: f32[1,32], index: 10, kind: input, shape index: {}]
  %s11 = inlined_call_operand.vmem [shape: f32[1,32], index: 11, kind: input, shape index: {}]
  %s12 = inlined_call_operand.hbm [shape: f32[2,8,32], index: 12, kind: output, shape index: {}]
  %s13 = sld [smem:[#allocation0]]
  $region85: #{tpu_custom_call.1} parent=0
    _
  %s15 = ssub.s32 1, %s13
  %s16 = scalar_select 0, %s15, %s13
  $region1: #{tpu_custom_call.1} parent=0
    #allocation2 [shape = 'u8[8192]{0}', space=vmem, size = 0x2000, scoped, tag = 'input window, operand 0']
    #allocation3 [shape = 's32[2]{0}', space=sflag, size = 0x8, scoped, tag = 'scoped memory for tpu_custom_call.1']
    #allocation4 [shape = 's32[2]{0}', space=sflag, size = 0x8, scoped, tag = 'scoped memory for tpu_custom_call.1']
    #allocation5 [shape = 'u8[8192]{0}', space=vmem, size = 0x2000, scoped, tag = 'output window, operand 0']
    %17 = vsyncpa [#allocation3], 0
    %s18 = scalar_lea.sflag [#allocation3], 1
    %19 = vsyncpa %s18, 0
    %20 = vsyncpa [#allocation4], 0
    %s21 = scalar_lea.sflag [#allocation4], 1
    %22 = vsyncpa %s21, 0
    loop: start=0, step=1, limit=4
    $region2: #{tpu_custom_call.1} parent=1 // loop_pre_header
      _
    $region3: #{tpu_custom_call.1} parent=1 // loop_header
      %s24 = sphi 0, %s28
      %p25 = scmp.ge.s32.totalorder %s24, 4
      %s34 = sphi 0, %s36
      %s37 = sphi 0, %s34
      %s38 = sphi 0, %s37
      %s54 = sphi 0, %s38
      %s58 = sphi 0, %s58
      %s60 = sphi 0, %s58
      %s61 = sphi 0, %s60
      %s75 = sphi 0, %s61
      %s79 = sphi 0, %s79
      %s81 = sphi 0, %s79
      %s82 = sphi 0, %s81
      %s96 = sphi 0, %s82
      %s100 = sphi 0, %s100
      %s102 = sphi 0, %s100
      %s103 = sphi 0, %s102
      %s117 = sphi 0, %s103
      %s121 = sphi 0, %s121
      %s123 = sphi 0, %s121
      %s124 = sphi 0, %s123
      %s138 = sphi 0, %s124
      %s142 = sphi 0, %s142
      %s144 = sphi 0, %s142
      %s145 = sphi 0, %s144
      %s159 = sphi 0, %s145
      %s163 = sphi 0, %s163
      %s165 = sphi 0, %s163
      %s166 = sphi 0, %s165
      %s180 = sphi 0, %s166
      %s184 = sphi 0, %s184
      %s186 = sphi 0, %s184
      %s187 = sphi 0, %s186
      %s201 = sphi 0, %s187
      %s205 = sphi 0, %s205
      %s207 = sphi 0, %s205
      %s208 = sphi 0, %s207
      %s222 = sphi 0, %s208
      %s226 = sphi 0, %s226
      %s228 = sphi 0, %s226
      %s229 = sphi 0, %s228
      %s243 = sphi 0, %s229
      %s247 = sphi 0, %s247
      %s249 = sphi 0, %s247
      %s250 = sphi 0, %s249
      %s264 = sphi 0, %s250
      %s268 = sphi 0, %s268
      %s270 = sphi 0, %s268
      %s271 = sphi 0, %s270
      %s285 = sphi 0, %s271
      %s291 = sphi 0, %s293
      %s294 = sphi 0, %s291
      %s295 = sphi 0, %s294
      %s311 = sphi 0, %s295
    $region4: #{tpu_custom_call.1} parent=1 // loop_header_branch
      %27 = sbr.rel (%p25) target = $region8
    $region5: #{tpu_custom_call.1} parent=1 // loop_body
      %s29 = ssub.s32 %s24, 1
      %s30 = ssub.s32 %s24, 2
      %s31 = sadd.s32 %s24, 1
      %s32 = ssub.s32 %s24, %s31
      %p33 = scmp.eq.s32.totalorder %s32, 0
      %s35 = sadd.s32 %s34, 1
      %s36 = scalar_select %p33, %s34, %s35
      %p39 = pneg %p33
      %p40 = scmp.eq.s32.totalorder %s24, 1
      %p41 = por %p39, %p40
      %p42 = scmp.ne.s32.totalorder %s34, %s37
      %p43 = scmp.eq.s32.totalorder %s24, 0
      %p44 = por %p42, %p43
      %p45 = scmp.ne.s32.totalorder %s34, %s37
      %p46 = scmp.eq.s32.totalorder %s29, 1
      %p47 = por %p45, %p46
      %p48 = scmp.ne.s32.totalorder %s37, %s38
      %p49 = scmp.eq.s32.totalorder %s29, 0
      %p50 = por %p48, %p49
      %p51 = scmp.ne.s32.totalorder %s37, %s38
      %p52 = scmp.eq.s32.totalorder %s30, 1
      %p53 = por %p51, %p52
      %p55 = scmp.ne.s32.totalorder %s38, %s54
      %p56 = scmp.eq.s32.totalorder %s30, 0
      %p57 = por %p55, %p56
      %s59 = sadd.s32 %s58, 1
      %p62 = scmp.eq.s32.totalorder %s24, 1
      %p63 = scmp.ne.s32.totalorder %s58, %s60
      %p64 = scmp.eq.s32.totalorder %s24, 0
      %p65 = por %p63, %p64
      %p66 = scmp.ne.s32.totalorder %s58, %s60
      %p67 = scmp.eq.s32.totalorder %s29, 1
      %p68 = por %p66, %p67
      %p69 = scmp.ne.s32.totalorder %s60, %s61
      %p70 = scmp.eq.s32.totalorder %s29, 0
      %p71 = por %p69, %p70
      %p72 = scmp.ne.s32.totalorder %s60, %s61
      %p73 = scmp.eq.s32.totalorder %s30, 1
      %p74 = por %p72, %p73
      %p76 = scmp.ne.s32.totalorder %s61, %s75
      %p77 = scmp.eq.s32.totalorder %s30, 0
      %p78 = por %p76, %p77
      %s80 = sadd.s32 %s79, 1
      %p83 = scmp.eq.s32.totalorder %s24, 1
      %p84 = scmp.ne.s32.totalorder %s79, %s81
      %p85 = scmp.eq.s32.totalorder %s24, 0
      %p86 = por %p84, %p85
      %p87 = scmp.ne.s32.totalorder %s79, %s81
      %p88 = scmp.eq.s32.totalorder %s29, 1
      %p89 = por %p87, %p88
      %p90 = scmp.ne.s32.totalorder %s81, %s82
      %p91 = scmp.eq.s32.totalorder %s29, 0
      %p92 = por %p90, %p91
      %p93 = scmp.ne.s32.totalorder %s81, %s82
      %p94 = scmp.eq.s32.totalorder %s30, 1
      %p95 = por %p93, %p94
      %p97 = scmp.ne.s32.totalorder %s82, %s96
      %p98 = scmp.eq.s32.totalorder %s30, 0
      %p99 = por %p97, %p98
      %s101 = sadd.s32 %s100, 1
      %p104 = scmp.eq.s32.totalorder %s24, 1
      %p105 = scmp.ne.s32.totalorder %s100, %s102
      %p106 = scmp.eq.s32.totalorder %s24, 0
      %p107 = por %p105, %p106
      %p108 = scmp.ne.s32.totalorder %s100, %s102
      %p109 = scmp.eq.s32.totalorder %s29, 1
      %p110 = por %p108, %p109
      %p111 = scmp.ne.s32.totalorder %s102, %s103
      %p112 = scmp.eq.s32.totalorder %s29, 0
      %p113 = por %p111, %p112
      %p114 = scmp.ne.s32.totalorder %s102, %s103
      %p115 = scmp.eq.s32.totalorder %s30, 1
      %p116 = por %p114, %p115
      %p118 = scmp.ne.s32.totalorder %s103, %s117
      %p119 = scmp.eq.s32.totalorder %s30, 0
      %p120 = por %p118, %p119
      %s122 = sadd.s32 %s121, 1
      %p125 = scmp.eq.s32.totalorder %s24, 1
      %p126 = scmp.ne.s32.totalorder %s121, %s123
      %p127 = scmp.eq.s32.totalorder %s24, 0
      %p128 = por %p126, %p127
      %p129 = scmp.ne.s32.totalorder %s121, %s123
      %p130 = scmp.eq.s32.totalorder %s29, 1
      %p131 = por %p129, %p130
      %p132 = scmp.ne.s32.totalorder %s123, %s124
      %p133 = scmp.eq.s32.totalorder %s29, 0
      %p134 = por %p132, %p133
      %p135 = scmp.ne.s32.totalorder %s123, %s124
      %p136 = scmp.eq.s32.totalorder %s30, 1
      %p137 = por %p135, %p136
      %p139 = scmp.ne.s32.totalorder %s124, %s138
      %p140 = scmp.eq.s32.totalorder %s30, 0
      %p141 = por %p139, %p140
      %s143 = sadd.s32 %s142, 1
      %p146 = scmp.eq.s32.totalorder %s24, 1
      %p147 = scmp.ne.s32.totalorder %s142, %s144
      %p148 = scmp.eq.s32.totalorder %s24, 0
      %p149 = por %p147, %p148
      %p150 = scmp.ne.s32.totalorder %s142, %s144
      %p151 = scmp.eq.s32.totalorder %s29, 1
      %p152 = por %p150, %p151
      %p153 = scmp.ne.s32.totalorder %s144, %s145
      %p154 = scmp.eq.s32.totalorder %s29, 0
      %p155 = por %p153, %p154
      %p156 = scmp.ne.s32.totalorder %s144, %s145
      %p157 = scmp.eq.s32.totalorder %s30, 1
      %p158 = por %p156, %p157
      %p160 = scmp.ne.s32.totalorder %s145, %s159
      %p161 = scmp.eq.s32.totalorder %s30, 0
      %p162 = por %p160, %p161
      %s164 = sadd.s32 %s163, 1
      %p167 = scmp.eq.s32.totalorder %s24, 1
      %p168 = scmp.ne.s32.totalorder %s163, %s165
      %p169 = scmp.eq.s32.totalorder %s24, 0
      %p170 = por %p168, %p169
      %p171 = scmp.ne.s32.totalorder %s163, %s165
      %p172 = scmp.eq.s32.totalorder %s29, 1
      %p173 = por %p171, %p172
      %p174 = scmp.ne.s32.totalorder %s165, %s166
      %p175 = scmp.eq.s32.totalorder %s29, 0
      %p176 = por %p174, %p175
      %p177 = scmp.ne.s32.totalorder %s165, %s166
      %p178 = scmp.eq.s32.totalorder %s30, 1
      %p179 = por %p177, %p178
      %p181 = scmp.ne.s32.totalorder %s166, %s180
      %p182 = scmp.eq.s32.totalorder %s30, 0
      %p183 = por %p181, %p182
      %s185 = sadd.s32 %s184, 1
      %p188 = scmp.eq.s32.totalorder %s24, 1
      %p189 = scmp.ne.s32.totalorder %s184, %s186
      %p190 = scmp.eq.s32.totalorder %s24, 0
      %p191 = por %p189, %p190
      %p192 = scmp.ne.s32.totalorder %s184, %s186
      %p193 = scmp.eq.s32.totalorder %s29, 1
      %p194 = por %p192, %p193
      %p195 = scmp.ne.s32.totalorder %s186, %s187
      %p196 = scmp.eq.s32.totalorder %s29, 0
      %p197 = por %p195, %p196
      %p198 = scmp.ne.s32.totalorder %s186, %s187
      %p199 = scmp.eq.s32.totalorder %s30, 1
      %p200 = por %p198, %p199
      %p202 = scmp.ne.s32.totalorder %s187, %s201
      %p203 = scmp.eq.s32.totalorder %s30, 0
      %p204 = por %p202, %p203
      %s206 = sadd.s32 %s205, 1
      %p209 = scmp.eq.s32.totalorder %s24, 1
      %p210 = scmp.ne.s32.totalorder %s205, %s207
      %p211 = scmp.eq.s32.totalorder %s24, 0
      %p212 = por %p210, %p211
      %p213 = scmp.ne.s32.totalorder %s205, %s207
      %p214 = scmp.eq.s32.totalorder %s29, 1
      %p215 = por %p213, %p214
      %p216 = scmp.ne.s32.totalorder %s207, %s208
      %p217 = scmp.eq.s32.totalorder %s29, 0
      %p218 = por %p216, %p217
      %p219 = scmp.ne.s32.totalorder %s207, %s208
      %p220 = scmp.eq.s32.totalorder %s30, 1
      %p221 = por %p219, %p220
      %p223 = scmp.ne.s32.totalorder %s208, %s222
      %p224 = scmp.eq.s32.totalorder %s30, 0
      %p225 = por %p223, %p224
      %s227 = sadd.s32 %s226, 1
      %p230 = scmp.eq.s32.totalorder %s24, 1
      %p231 = scmp.ne.s32.totalorder %s226, %s228
      %p232 = scmp.eq.s32.totalorder %s24, 0
      %p233 = por %p231, %p232
      %p234 = scmp.ne.s32.totalorder %s226, %s228
      %p235 = scmp.eq.s32.totalorder %s29, 1
      %p236 = por %p234, %p235
      %p237 = scmp.ne.s32.totalorder %s228, %s229
      %p238 = scmp.eq.s32.totalorder %s29, 0
      %p239 = por %p237, %p238
      %p240 = scmp.ne.s32.totalorder %s228, %s229
      %p241 = scmp.eq.s32.totalorder %s30, 1
      %p242 = por %p240, %p241
      %p244 = scmp.ne.s32.totalorder %s229, %s243
      %p245 = scmp.eq.s32.totalorder %s30, 0
      %p246 = por %p244, %p245
      %s248 = sadd.s32 %s247, 1
      %p251 = scmp.eq.s32.totalorder %s24, 1
      %p252 = scmp.ne.s32.totalorder %s247, %s249
      %p253 = scmp.eq.s32.totalorder %s24, 0
      %p254 = por %p252, %p253
      %p255 = scmp.ne.s32.totalorder %s247, %s249
      %p256 = scmp.eq.s32.totalorder %s29, 1
      %p257 = por %p255, %p256
      %p258 = scmp.ne.s32.totalorder %s249, %s250
      %p259 = scmp.eq.s32.totalorder %s29, 0
      %p260 = por %p258, %p259
      %p261 = scmp.ne.s32.totalorder %s249, %s250
      %p262 = scmp.eq.s32.totalorder %s30, 1
      %p263 = por %p261, %p262
      %p265 = scmp.ne.s32.totalorder %s250, %s264
      %p266 = scmp.eq.s32.totalorder %s30, 0
      %p267 = por %p265, %p266
      %s269 = sadd.s32 %s268, 1
      %p272 = scmp.eq.s32.totalorder %s24, 1
      %p273 = scmp.ne.s32.totalorder %s268, %s270
      %p274 = scmp.eq.s32.totalorder %s24, 0
      %p275 = por %p273, %p274
      %p276 = scmp.ne.s32.totalorder %s268, %s270
      %p277 = scmp.eq.s32.totalorder %s29, 1
      %p278 = por %p276, %p277
      %p279 = scmp.ne.s32.totalorder %s270, %s271
      %p280 = scmp.eq.s32.totalorder %s29, 0
      %p281 = por %p279, %p280
      %p282 = scmp.ne.s32.totalorder %s270, %s271
      %p283 = scmp.eq.s32.totalorder %s30, 1
      %p284 = por %p282, %p283
      %p286 = scmp.ne.s32.totalorder %s271, %s285
      %p287 = scmp.eq.s32.totalorder %s30, 0
      %p288 = por %p286, %p287
      %s289 = ssub.s32 %s24, %s31
      %p290 = scmp.eq.s32.totalorder %s289, 0
      %s292 = sadd.s32 %s291, 1
      %s293 = scalar_select %p290, %s291, %s292
      %p296 = pneg %p290
      %p297 = scmp.eq.s32.totalorder %s24, 1
      %p298 = por %p296, %p297
      %p299 = scmp.ne.s32.totalorder %s291, %s294
      %p300 = scmp.eq.s32.totalorder %s24, 0
      %p301 = por %p299, %p300
      %p302 = scmp.ne.s32.totalorder %s291, %s294
      %p303 = scmp.eq.s32.totalorder %s29, 1
      %p304 = por %p302, %p303
      %p305 = scmp.ne.s32.totalorder %s294, %s295
      %p306 = scmp.eq.s32.totalorder %s29, 0
      %p307 = por %p305, %p306
      %p308 = scmp.ne.s32.totalorder %s294, %s295
      %p309 = scmp.eq.s32.totalorder %s30, 1
      %p310 = por %p308, %p309
      %p312 = scmp.ne.s32.totalorder %s295, %s311
      %p313 = scmp.eq.s32.totalorder %s30, 0
      %p314 = por %p312, %p313
      %p315 = scmp.le.s32.totalorder 1, %s24
      %p316 = scmp.lt.s32.totalorder %s24, 3
      %p317 = pnand %p315, %p316
      %p318 = pneg %p317
      // Predicated region
      $region9: #{tpu_custom_call.1} parent=5 // pred_check
        _
      $region10: #{tpu_custom_call.1} parent=5 // pred_check_branch
        %320 = sbr.rel (%p317) target = $region12
      $region11: #{tpu_custom_call.1} parent=5 // pred_region
        %s321 = ssub.s32 %s24, 1
        // Predicated region
        $region13: #{tpu_custom_call.1} parent=11 // pred_check
          %p322 = pneg %p71
        $region14: #{tpu_custom_call.1} parent=11 // pred_check_branch
          %324 = sbr.rel (%p322) target = $region16
        $region15: #{tpu_custom_call.1} parent=11 // pred_region
          _
        $region16: #{tpu_custom_call.1} parent=11 // pred_fallthru
          _
        // Predicated region
        $region17: #{tpu_custom_call.1} parent=11 // pred_check
          %p325 = pneg %p92
        $region18: #{tpu_custom_call.1} parent=11 // pred_check_branch
          %327 = sbr.rel (%p325) target = $region20
        $region19: #{tpu_custom_call.1} parent=11 // pred_region
          _
        $region20: #{tpu_custom_call.1} parent=11 // pred_fallthru
          _
        // Predicated region
        $region21: #{tpu_custom_call.1} parent=11 // pred_check
          %p328 = pneg %p113
        $region22: #{tpu_custom_call.1} parent=11 // pred_check_branch
          %330 = sbr.rel (%p328) target = $region24
        $region23: #{tpu_custom_call.1} parent=11 // pred_region
          _
        $region24: #{tpu_custom_call.1} parent=11 // pred_fallthru
          _
        // Predicated region
        $region25: #{tpu_custom_call.1} parent=11 // pred_check
          %p331 = pneg %p134
        $region26: #{tpu_custom_call.1} parent=11 // pred_check_branch
          %333 = sbr.rel (%p331) target = $region28
        $region27: #{tpu_custom_call.1} parent=11 // pred_region
          _
        $region28: #{tpu_custom_call.1} parent=11 // pred_fallthru
          _
        // Predicated region
        $region29: #{tpu_custom_call.1} parent=11 // pred_check
          %p334 = pneg %p155
        $region30: #{tpu_custom_call.1} parent=11 // pred_check_branch
          %336 = sbr.rel (%p334) target = $region32
        $region31: #{tpu_custom_call.1} parent=11 // pred_region
          _
        $region32: #{tpu_custom_call.1} parent=11 // pred_fallthru
          _
        // Predicated region
        $region33: #{tpu_custom_call.1} parent=11 // pred_check
          %p337 = pneg %p176
        $region34: #{tpu_custom_call.1} parent=11 // pred_check_branch
          %339 = sbr.rel (%p337) target = $region36
        $region35: #{tpu_custom_call.1} parent=11 // pred_region
          _
        $region36: #{tpu_custom_call.1} parent=11 // pred_fallthru
          _
        // Predicated region
        $region37: #{tpu_custom_call.1} parent=11 // pred_check
          %p340 = pneg %p197
        $region38: #{tpu_custom_call.1} parent=11 // pred_check_branch
          %342 = sbr.rel (%p340) target = $region40
        $region39: #{tpu_custom_call.1} parent=11 // pred_region
          _
        $region40: #{tpu_custom_call.1} parent=11 // pred_fallthru
          _
        // Predicated region
        $region41: #{tpu_custom_call.1} parent=11 // pred_check
          %p343 = pneg %p218
        $region42: #{tpu_custom_call.1} parent=11 // pred_check_branch
          %345 = sbr.rel (%p343) target = $region44
        $region43: #{tpu_custom_call.1} parent=11 // pred_region
          _
        $region44: #{tpu_custom_call.1} parent=11 // pred_fallthru
          _
        // Predicated region
        $region45: #{tpu_custom_call.1} parent=11 // pred_check
          %p346 = pneg %p239
        $region46: #{tpu_custom_call.1} parent=11 // pred_check_branch
          %348 = sbr.rel (%p346) target = $region48
        $region47: #{tpu_custom_call.1} parent=11 // pred_region
          _
        $region48: #{tpu_custom_call.1} parent=11 // pred_fallthru
          _
        // Predicated region
        $region49: #{tpu_custom_call.1} parent=11 // pred_check
          %p349 = pneg %p260
        $region50: #{tpu_custom_call.1} parent=11 // pred_check_branch
          %351 = sbr.rel (%p349) target = $region52
        $region51: #{tpu_custom_call.1} parent=11 // pred_region
          _
        $region52: #{tpu_custom_call.1} parent=11 // pred_fallthru
          _
        // Predicated region
        $region53: #{tpu_custom_call.1} parent=11 // pred_check
          %p352 = pneg %p281
        $region54: #{tpu_custom_call.1} parent=11 // pred_check_branch
          %354 = sbr.rel (%p352) target = $region56
        $region55: #{tpu_custom_call.1} parent=11 // pred_region
          _
        $region56: #{tpu_custom_call.1} parent=11 // pred_fallthru
          _
      $region12: #{tpu_custom_call.1} parent=5 // pred_fallthru
        _
      %p355 = scmp.lt.s32.totalorder %s24, 2
      // Predicated region
      $region57: #{tpu_custom_call.1} parent=5 // pred_check
        %p356 = pneg %p355
      $region58: #{tpu_custom_call.1} parent=5 // pred_check_branch
        %358 = sbr.rel (%p356) target = $region60
      $region59: #{tpu_custom_call.1} parent=5 // pred_region
        // Predicated region
        $region61: #{tpu_custom_call.1} parent=59 // pred_check
          %p359 = pneg %p44
        $region62: #{tpu_custom_call.1} parent=59 // pred_check_branch
          %361 = sbr.rel (%p359) target = $region64
        $region63: #{tpu_custom_call.1} parent=59 // pred_region
          %s362 = sand.u32 %s34, 1
          %s363 = scalar_lea.sflag [#allocation3], %s362
          %s364 = sand.u32 %s34, 1
          %s365 = smul.addr %s364, 8
          %s366 = scalar_lea.vmem [#allocation2], %s365
          %s368 = ssub.s32 128, 128
          %369 = vsyncadd %s363, %s368
          %s370 = smul.addr %s24, 128
          %s371 = scalar_lea.hbm %s0, %s370
          %s373 = sshll.u32 %s366, 4
          %s374 = int_to_ptr.vmem [resolvable:$true] %s373
          %376 = dma.hbm_to_vmem [thread:$0]  %s371, 128, %s374, %s363
        $region64: #{tpu_custom_call.1} parent=59 // pred_fallthru
          _
      $region60: #{tpu_custom_call.1} parent=5 // pred_fallthru
        _
      %p377 = scmp.le.s32.totalorder 1, %s24
      %p378 = scmp.lt.s32.totalorder %s24, 3
      %p379 = pnand %p377, %p378
      %p380 = pneg %p379
      // Predicated region
      $region65: #{tpu_custom_call.1} parent=5 // pred_check
        _
      $region66: #{tpu_custom_call.1} parent=5 // pred_check_branch
        %382 = sbr.rel (%p379) target = $region68
      $region67: #{tpu_custom_call.1} parent=5 // pred_region
        %s383 = ssub.s32 %s24, 1
        %s384 = sand.u32 %s37, 1
        %s385 = scalar_lea.sflag [#allocation3], %s384
        %s386 = sand.u32 %s37, 1
        %s387 = smul.addr %s386, 8
        %s388 = scalar_lea.vmem [#allocation2], %s387
        // Predicated region
        $region69: #{tpu_custom_call.1} parent=67 // pred_check
          %p389 = pneg %p50
        $region70: #{tpu_custom_call.1} parent=67 // pred_check_branch
          %391 = sbr.rel (%p389) target = $region72
        $region71: #{tpu_custom_call.1} parent=67 // pred_region
          %392 = dma.done %s385, 128
        $region72: #{tpu_custom_call.1} parent=67 // pred_fallthru
          _
        %s393 = sand.u32 %s37, 1
        %s394 = scalar_lea.sflag [#allocation3], %s393
        %s395 = sand.u32 %s37, 1
        %s396 = smul.addr %s395, 8
        %s397 = scalar_lea.vmem [#allocation2], %s396
        %p398 = pneg %p50
        %p399 = pneg %p47
        %p400 = pneg %p71
        %p401 = pneg %p68
        %p402 = pneg %p92
        %p403 = pneg %p89
        %p404 = pneg %p113
        %p405 = pneg %p110
        %p406 = pneg %p134
        %p407 = pneg %p131
        %p408 = pneg %p155
        %p409 = pneg %p152
        %p410 = pneg %p176
        %p411 = pneg %p173
        %p412 = pneg %p197
        %p413 = pneg %p194
        %p414 = pneg %p218
        %p415 = pneg %p215
        %p416 = pneg %p239
        %p417 = pneg %p236
        %p418 = pneg %p260
        %p419 = pneg %p257
        %p420 = pneg %p281
        %p421 = pneg %p278
        %p422 = pneg %p307
        %p423 = pneg %p304
        %s424 = sand.u32 %s294, 1
        %s425 = scalar_lea.sflag [#allocation4], %s424
        %s426 = sand.u32 %s294, 1
        %s427 = smul.addr %s426, 8
        %s428 = scalar_lea.vmem [#allocation5], %s427
        %v429 = vld [vmem:[%s388] sm:$0xff]
        %v430 = vld [vmem:[%s1] sm:$0xff]
        %v431 = vld [vmem:[%s1 + $0x8] sm:$0xff]
        %v432 = vld [vmem:[%s1 + $0x10] sm:$0xff]
        %v433 = vld [vmem:[%s1 + $0x18] sm:$0xff]
        %vm434 = vcmask 261120
        %v436 = vsel %vm434, %v429, 0
        %438 = vmatprep.subr.mxu0 0.0
        %439 = vmatpush1.msra.mxu0 0.0
        %440 = vmatprep.subr.mxu0 0.0
        %441 = vmatpush1.msra.mxu0 0.0
        %442 = vmatprep.subr.mxu0 0.0
        %443 = vmatpush1.msra.mxu0 0.0
        %444 = vmatprep.subr.mxu0 0.0
        %445 = vmatpush1.msra.mxu0 0.0
        %446 = vmatprep.subr.mxu0 0.0
        %447 = vmatpush1.msra.mxu0 0.0
        %448 = vmatprep.subr.mxu0 0.0
        %449 = vmatpush1.msra.mxu0 0.0
        %450 = vmatprep.subr.mxu0 0.0
        %451 = vmatpush1.msra.mxu0 0.0
        %452 = vmatprep.subr.mxu0 0.0
        %453 = vmatpush1.msra.mxu0 0.0
        %454 = vmatprep.subr.mxu0 0.0
        %455 = vmatpush1.msra.mxu0 0.0
        %456 = vmatprep.subr.mxu0 0.0
        %457 = vmatpush1.msra.mxu0 0.0
        %458 = vmatprep.subr.mxu0 0.0
        %459 = vmatpush1.msra.mxu0 0.0
        %460 = vmatprep.subr.mxu0 0.0
        %461 = vmatpush1.msra.mxu0 0.0
        %462 = vmatprep.subr.mxu0 0.0
        %463 = vmatpush1.msra.mxu0 %v433
        %464 = vmatprep.subr.mxu0 0.0
        %465 = vmatpush1.msra.mxu0 %v432
        %466 = vmatprep.subr.mxu0 0.0
        %467 = vmatpush1.msra.mxu0 %v431
        %468 = vmatprep.subr.mxu0 0.0
        %469 = vmatpush1.msra.mxu0 %v430
        %470 = vmatprep.subr.mxu0 0.0
        %471 = vmatpush2.msra.mxu0 0.0
        %472 = vmatprep.subr.mxu0 0.0
        %473 = vmatpush2.msra.mxu0 0.0
        %474 = vmatprep.subr.mxu0 0.0
        %475 = vmatpush2.msra.mxu0 0.0
        %476 = vmatprep.subr.mxu0 0.0
        %477 = vmatpush2.msra.mxu0 0.0
        %478 = vmatprep.subr.mxu0 0.0
        %479 = vmatpush2.msra.mxu0 0.0
        %480 = vmatprep.subr.mxu0 0.0
        %481 = vmatpush2.msra.mxu0 0.0
        %482 = vmatprep.subr.mxu0 0.0
        %483 = vmatpush2.msra.mxu0 0.0
        %484 = vmatprep.subr.mxu0 0.0
        %485 = vmatpush2.msra.mxu0 0.0
        %486 = vmatprep.subr.mxu0 0.0
        %487 = vmatpush2.msra.mxu0 0.0
        %488 = vmatprep.subr.mxu0 0.0
        %489 = vmatpush2.msra.mxu0 0.0
        %490 = vmatprep.subr.mxu0 0.0
        %491 = vmatpush2.msra.mxu0 0.0
        %492 = vmatprep.subr.mxu0 0.0
        %493 = vmatpush2.msra.mxu0 0.0
        %494 = vmatprep.subr.mxu0 0.0
        %495 = vmatpush2.msra.mxu0 0.0
        %496 = vmatprep.subr.mxu0 0.0
        %497 = vmatpush2.msra.mxu0 0.0
        %498 = vmatprep.subr.mxu0 0.0
        %499 = vmatpush2.msra.mxu0 0.0
        %500 = vmatprep.subr.mxu0 0.0
        %501 = vmatpush2.msra.mxu0 0.0
        %502 = vmatprep.mubr.f32.mxu0 0.0
        %503 = vmatmul.mubr.f32.gmra.mxu0 %v436
        %v504 = vpop.f32.mrf.mxu0
        %v505 = vadd.f32 0.0, %v504
        %v506 = vpop.f32.mrf.mxu0
        %507 = vdwg.mxu0
        %v508 = vld [vmem:[%s2] sm:$0xff]
        %v509 = vld [vmem:[%s2 + $0x8] sm:$0xff]
        %v510 = vld [vmem:[%s2 + $0x10] sm:$0xff]
        %v511 = vld [vmem:[%s2 + $0x18] sm:$0xff]
        %v512 = vld [vmem:[%s3] sm:$0x1]
        %v514 = vlaneseq
        %v515 = vshrl.u32 %v514, 7
        %v516 = vsub.s32 0, %v515
        %v517 = vrot.slane %v512, %v516
        %v519 = vadd.f32 %v429, %v517
        %v520 = vmul.f32 %v505, 0.35355338
        %522 = vrot.lane.b32.xlu0 %v505, 96
        %v523 = vpop.permute.xlu0 %522
        %vm524 = vcmask 64512
        %v526 = vsel %vm524, %v520, 0
        %v528 = vsel %vm524, %v523, 0
        %530 = vmatprep.subr.mxu0 0.0
        %531 = vmatpush1.xpose.msra.mxu0 0.0
        %532 = vmatprep.subr.mxu0 0.0
        %533 = vmatpush1.xpose.msra.mxu0 0.0
        %534 = vmatprep.subr.mxu0 0.0
        %535 = vmatpush1.xpose.msra.mxu0 0.0
        %536 = vmatprep.subr.mxu0 0.0
        %537 = vmatpush1.xpose.msra.mxu0 0.0
        %538 = vmatprep.subr.mxu0 0.0
        %539 = vmatpush1.xpose.msra.mxu0 0.0
        %540 = vmatprep.subr.mxu0 0.0
        %541 = vmatpush1.xpose.msra.mxu0 0.0
        %542 = vmatprep.subr.mxu0 0.0
        %543 = vmatpush1.xpose.msra.mxu0 0.0
        %544 = vmatprep.subr.mxu0 0.0
        %545 = vmatpush1.xpose.msra.mxu0 0.0
        %546 = vmatprep.subr.mxu0 0.0
        %547 = vmatpush1.xpose.msra.mxu0 0.0
        %548 = vmatprep.subr.mxu0 0.0
        %549 = vmatpush1.xpose.msra.mxu0 0.0
        %550 = vmatprep.subr.mxu0 0.0
        %551 = vmatpush1.xpose.msra.mxu0 0.0
        %552 = vmatprep.subr.mxu0 0.0
        %553 = vmatpush1.xpose.msra.mxu0 0.0
        %554 = vmatprep.subr.mxu0 0.0
        %555 = vmatpush1.xpose.msra.mxu0 0.0
        %556 = vmatprep.subr.mxu0 0.0
        %557 = vmatpush1.xpose.msra.mxu0 0.0
        %558 = vmatprep.subr.mxu0 0.0
        %559 = vmatpush1.xpose.msra.mxu0 0.0
        %560 = vmatprep.subr.mxu0 0.0
        %561 = vmatpush1.xpose.msra.mxu0 %v528
        %562 = vmatprep.subr.mxu0 0.0
        %563 = vmatpush2.xpose.msra.mxu0 0.0
        %564 = vmatprep.subr.mxu0 0.0
        %565 = vmatpush2.xpose.msra.mxu0 0.0
        %566 = vmatprep.subr.mxu0 0.0
        %567 = vmatpush2.xpose.msra.mxu0 0.0
        %568 = vmatprep.subr.mxu0 0.0
        %569 = vmatpush2.xpose.msra.mxu0 0.0
        %570 = vmatprep.subr.mxu0 0.0
        %571 = vmatpush2.xpose.msra.mxu0 0.0
        %572 = vmatprep.subr.mxu0 0.0
        %573 = vmatpush2.xpose.msra.mxu0 0.0
        %574 = vmatprep.subr.mxu0 0.0
        %575 = vmatpush2.xpose.msra.mxu0 0.0
        %576 = vmatprep.subr.mxu0 0.0
        %577 = vmatpush2.xpose.msra.mxu0 0.0
        %578 = vmatprep.subr.mxu0 0.0
        %579 = vmatpush2.xpose.msra.mxu0 0.0
        %580 = vmatprep.subr.mxu0 0.0
        %581 = vmatpush2.xpose.msra.mxu0 0.0
        %582 = vmatprep.subr.mxu0 0.0
        %583 = vmatpush2.xpose.msra.mxu0 0.0
        %584 = vmatprep.subr.mxu0 0.0
        %585 = vmatpush2.xpose.msra.mxu0 0.0
        %586 = vmatprep.subr.mxu0 0.0
        %587 = vmatpush2.xpose.msra.mxu0 0.0
        %588 = vmatprep.subr.mxu0 0.0
        %589 = vmatpush2.xpose.msra.mxu0 0.0
        %590 = vmatprep.subr.mxu0 0.0
        %591 = vmatpush2.xpose.msra.mxu0 0.0
        %592 = vmatprep.subr.mxu0 0.0
        %593 = vmatpush2.xpose.msra.mxu0 0.0
        %594 = vmatprep.mubr.f32.mxu0 0.0
        %595 = vmatmul.mubr.f32.gmra.mxu0 %v526
        %v596 = vpop.f32.mrf.mxu0
        %v597 = vadd.f32 0.0, %v596
        %v598 = vpop.f32.mrf.mxu0
        %599 = vdwg.mxu0
        %v600 = vsel %vm524, %v597, -inf
        %601 = vmax.xlane.f32.xlu0 %v600
        %v602 = vpop.xlane.xlu0 %601
        %v603 = vsub.f32 %v597, %v602
        %v604 = vmul.f32 %v603, 1.442695
        %v605 = vpow.pop %v604
        %v606 = vsel %vm524, %v605, 0.0
        %607 = vadd.xlane.f32.xlu0 %v606
        %v608 = vpop.xlane.xlu0 %607
        %v609 = vrcp.pop %v608
        %v610 = vmul.f32 %v605, %v609
        %611 = vrot.lane.b32.xlu0 %v505, 64
        %v612 = vpop.permute.xlu0 %611
        %v615 = vsel %vm524, %v610, 0
        %617 = vmatprep.subr.mxu0 0.0
        %618 = vmatpush1.msra.mxu0 0.0
        %619 = vmatprep.subr.mxu0 0.0
        %620 = vmatpush1.msra.mxu0 0.0
        %621 = vmatprep.subr.mxu0 0.0
        %622 = vmatpush1.msra.mxu0 0.0
        %623 = vmatprep.subr.mxu0 0.0
        %624 = vmatpush1.msra.mxu0 0.0
        %625 = vmatprep.subr.mxu0 0.0
        %626 = vmatpush1.msra.mxu0 0.0
        %627 = vmatprep.subr.mxu0 0.0
        %628 = vmatpush1.msra.mxu0 0.0
        %629 = vmatprep.subr.mxu0 0.0
        %630 = vmatpush1.msra.mxu0 0.0
        %631 = vmatprep.subr.mxu0 0.0
        %632 = vmatpush1.msra.mxu0 0.0
        %633 = vmatprep.subr.mxu0 0.0
        %634 = vmatpush1.msra.mxu0 0.0
        %635 = vmatprep.subr.mxu0 0.0
        %636 = vmatpush1.msra.mxu0 0.0
        %637 = vmatprep.subr.mxu0 0.0
        %638 = vmatpush1.msra.mxu0 0.0
        %639 = vmatprep.subr.mxu0 0.0
        %640 = vmatpush1.msra.mxu0 0.0
        %641 = vmatprep.subr.mxu0 0.0
        %642 = vmatpush1.msra.mxu0 0.0
        %643 = vmatprep.subr.mxu0 0.0
        %644 = vmatpush1.msra.mxu0 0.0
        %645 = vmatprep.subr.mxu0 0.0
        %646 = vmatpush1.msra.mxu0 0.0
        %647 = vmatprep.subr.mxu0 0.0
        %648 = vmatpush1.msra.mxu0 %v612
        %649 = vmatprep.subr.mxu0 0.0
        %650 = vmatpush2.msra.mxu0 0.0
        %651 = vmatprep.subr.mxu0 0.0
        %652 = vmatpush2.msra.mxu0 0.0
        %653 = vmatprep.subr.mxu0 0.0
        %654 = vmatpush2.msra.mxu0 0.0
        %655 = vmatprep.subr.mxu0 0.0
        %656 = vmatpush2.msra.mxu0 0.0
        %657 = vmatprep.subr.mxu0 0.0
        %658 = vmatpush2.msra.mxu0 0.0
        %659 = vmatprep.subr.mxu0 0.0
        %660 = vmatpush2.msra.mxu0 0.0
        %661 = vmatprep.subr.mxu0 0.0
        %662 = vmatpush2.msra.mxu0 0.0
        %663 = vmatprep.subr.mxu0 0.0
        %664 = vmatpush2.msra.mxu0 0.0
        %665 = vmatprep.subr.mxu0 0.0
        %666 = vmatpush2.msra.mxu0 0.0
        %667 = vmatprep.subr.mxu0 0.0
        %668 = vmatpush2.msra.mxu0 0.0
        %669 = vmatprep.subr.mxu0 0.0
        %670 = vmatpush2.msra.mxu0 0.0
        %671 = vmatprep.subr.mxu0 0.0
        %672 = vmatpush2.msra.mxu0 0.0
        %673 = vmatprep.subr.mxu0 0.0
        %674 = vmatpush2.msra.mxu0 0.0
        %675 = vmatprep.subr.mxu0 0.0
        %676 = vmatpush2.msra.mxu0 0.0
        %677 = vmatprep.subr.mxu0 0.0
        %678 = vmatpush2.msra.mxu0 0.0
        %679 = vmatprep.subr.mxu0 0.0
        %680 = vmatpush2.msra.mxu0 0.0
        %681 = vmatprep.mubr.f32.mxu0 0.0
        %682 = vmatmul.mubr.f32.gmra.mxu0 %v615
        %v683 = vpop.f32.mrf.mxu0
        %v684 = vadd.f32 0.0, %v683
        %v685 = vpop.f32.mrf.mxu0
        %686 = vdwg.mxu0
        %v688 = vsel %vm524, %v684, 0
        %690 = vmatprep.subr.mxu0 0.0
        %691 = vmatpush1.msra.mxu0 0.0
        %692 = vmatprep.subr.mxu0 0.0
        %693 = vmatpush1.msra.mxu0 0.0
        %694 = vmatprep.subr.mxu0 0.0
        %695 = vmatpush1.msra.mxu0 0.0
        %696 = vmatprep.subr.mxu0 0.0
        %697 = vmatpush1.msra.mxu0 0.0
        %698 = vmatprep.subr.mxu0 0.0
        %699 = vmatpush1.msra.mxu0 0.0
        %700 = vmatprep.subr.mxu0 0.0
        %701 = vmatpush1.msra.mxu0 0.0
        %702 = vmatprep.subr.mxu0 0.0
        %703 = vmatpush1.msra.mxu0 0.0
        %704 = vmatprep.subr.mxu0 0.0
        %705 = vmatpush1.msra.mxu0 0.0
        %706 = vmatprep.subr.mxu0 0.0
        %707 = vmatpush1.msra.mxu0 0.0
        %708 = vmatprep.subr.mxu0 0.0
        %709 = vmatpush1.msra.mxu0 0.0
        %710 = vmatprep.subr.mxu0 0.0
        %711 = vmatpush1.msra.mxu0 0.0
        %712 = vmatprep.subr.mxu0 0.0
        %713 = vmatpush1.msra.mxu0 0.0
        %714 = vmatprep.subr.mxu0 0.0
        %715 = vmatpush1.msra.mxu0 0.0
        %716 = vmatprep.subr.mxu0 0.0
        %717 = vmatpush1.msra.mxu0 0.0
        %718 = vmatprep.subr.mxu0 0.0
        %719 = vmatpush1.msra.mxu0 0.0
        %720 = vmatprep.subr.mxu0 0.0
        %721 = vmatpush1.msra.mxu0 %v508
        %722 = vmatprep.subr.mxu0 0.0
        %723 = vmatpush2.msra.mxu0 0.0
        %724 = vmatprep.subr.mxu0 0.0
        %725 = vmatpush2.msra.mxu0 0.0
        %726 = vmatprep.subr.mxu0 0.0
        %727 = vmatpush2.msra.mxu0 0.0
        %728 = vmatprep.subr.mxu0 0.0
        %729 = vmatpush2.msra.mxu0 0.0
        %730 = vmatprep.subr.mxu0 0.0
        %731 = vmatpush2.msra.mxu0 0.0
        %732 = vmatprep.subr.mxu0 0.0
        %733 = vmatpush2.msra.mxu0 0.0
        %734 = vmatprep.subr.mxu0 0.0
        %735 = vmatpush2.msra.mxu0 0.0
        %736 = vmatprep.subr.mxu0 0.0
        %737 = vmatpush2.msra.mxu0 0.0
        %738 = vmatprep.subr.mxu0 0.0
        %739 = vmatpush2.msra.mxu0 0.0
        %740 = vmatprep.subr.mxu0 0.0
        %741 = vmatpush2.msra.mxu0 0.0
        %742 = vmatprep.subr.mxu0 0.0
        %743 = vmatpush2.msra.mxu0 0.0
        %744 = vmatprep.subr.mxu0 0.0
        %745 = vmatpush2.msra.mxu0 0.0
        %746 = vmatprep.subr.mxu0 0.0
        %747 = vmatpush2.msra.mxu0 0.0
        %748 = vmatprep.subr.mxu0 0.0
        %749 = vmatpush2.msra.mxu0 0.0
        %750 = vmatprep.subr.mxu0 0.0
        %751 = vmatpush2.msra.mxu0 0.0
        %752 = vmatprep.subr.mxu0 0.0
        %753 = vmatpush2.msra.mxu0 0.0
        %754 = vmatprep.mubr.f32.mxu0 0.0
        %755 = vmatmul.mubr.f32.gmra.mxu0 %v688
        %v756 = vpop.f32.mrf.mxu0
        %v757 = vadd.f32 0.0, %v756
        %v758 = vpop.f32.mrf.mxu0
        %759 = vdwg.mxu0
        %v760 = vadd.f32 %v519, %v757
        %761 = vrot.lane.b32.xlu0 %v520, 120
        %v762 = vpop.permute.xlu0 %761
        %763 = vrot.lane.b32.xlu0 %v505, 88
        %v764 = vpop.permute.xlu0 %763
        %v765 = vsel %vm524, %v762, 0
        %v767 = vsel %vm524, %v764, 0
        %769 = vmatprep.subr.mxu0 0.0
        %770 = vmatpush1.xpose.msra.mxu0 0.0
        %771 = vmatprep.subr.mxu0 0.0
        %772 = vmatpush1.xpose.msra.mxu0 0.0
        %773 = vmatprep.subr.mxu0 0.0
        %774 = vmatpush1.xpose.msra.mxu0 0.0
        %775 = vmatprep.subr.mxu0 0.0
        %776 = vmatpush1.xpose.msra.mxu0 0.0
        %777 = vmatprep.subr.mxu0 0.0
        %778 = vmatpush1.xpose.msra.mxu0 0.0
        %779 = vmatprep.subr.mxu0 0.0
        %780 = vmatpush1.xpose.msra.mxu0 0.0
        %781 = vmatprep.subr.mxu0 0.0
        %782 = vmatpush1.xpose.msra.mxu0 0.0
        %783 = vmatprep.subr.mxu0 0.0
        %784 = vmatpush1.xpose.msra.mxu0 0.0
        %785 = vmatprep.subr.mxu0 0.0
        %786 = vmatpush1.xpose.msra.mxu0 0.0
        %787 = vmatprep.subr.mxu0 0.0
        %788 = vmatpush1.xpose.msra.mxu0 0.0
        %789 = vmatprep.subr.mxu0 0.0
        %790 = vmatpush1.xpose.msra.mxu0 0.0
        %791 = vmatprep.subr.mxu0 0.0
        %792 = vmatpush1.xpose.msra.mxu0 0.0
        %793 = vmatprep.subr.mxu0 0.0
        %794 = vmatpush1.xpose.msra.mxu0 0.0
        %795 = vmatprep.subr.mxu0 0.0
        %796 = vmatpush1.xpose.msra.mxu0 0.0
        %797 = vmatprep.subr.mxu0 0.0
        %798 = vmatpush1.xpose.msra.mxu0 0.0
        %799 = vmatprep.subr.mxu0 0.0
        %800 = vmatpush1.xpose.msra.mxu0 %v767
        %801 = vmatprep.subr.mxu0 0.0
        %802 = vmatpush2.xpose.msra.mxu0 0.0
        %803 = vmatprep.subr.mxu0 0.0
        %804 = vmatpush2.xpose.msra.mxu0 0.0
        %805 = vmatprep.subr.mxu0 0.0
        %806 = vmatpush2.xpose.msra.mxu0 0.0
        %807 = vmatprep.subr.mxu0 0.0
        %808 = vmatpush2.xpose.msra.mxu0 0.0
        %809 = vmatprep.subr.mxu0 0.0
        %810 = vmatpush2.xpose.msra.mxu0 0.0
        %811 = vmatprep.subr.mxu0 0.0
        %812 = vmatpush2.xpose.msra.mxu0 0.0
        %813 = vmatprep.subr.mxu0 0.0
        %814 = vmatpush2.xpose.msra.mxu0 0.0
        %815 = vmatprep.subr.mxu0 0.0
        %816 = vmatpush2.xpose.msra.mxu0 0.0
        %817 = vmatprep.subr.mxu0 0.0
        %818 = vmatpush2.xpose.msra.mxu0 0.0
        %819 = vmatprep.subr.mxu0 0.0
        %820 = vmatpush2.xpose.msra.mxu0 0.0
        %821 = vmatprep.subr.mxu0 0.0
        %822 = vmatpush2.xpose.msra.mxu0 0.0
        %823 = vmatprep.subr.mxu0 0.0
        %824 = vmatpush2.xpose.msra.mxu0 0.0
        %825 = vmatprep.subr.mxu0 0.0
        %826 = vmatpush2.xpose.msra.mxu0 0.0
        %827 = vmatprep.subr.mxu0 0.0
        %828 = vmatpush2.xpose.msra.mxu0 0.0
        %829 = vmatprep.subr.mxu0 0.0
        %830 = vmatpush2.xpose.msra.mxu0 0.0
        %831 = vmatprep.subr.mxu0 0.0
        %832 = vmatpush2.xpose.msra.mxu0 0.0
        %833 = vmatprep.mubr.f32.mxu0 0.0
        %834 = vmatmul.mubr.f32.gmra.mxu0 %v765
        %v835 = vpop.f32.mrf.mxu0
        %v836 = vadd.f32 0.0, %v835
        %v837 = vpop.f32.mrf.mxu0
        %838 = vdwg.mxu0
        %v839 = vsel %vm524, %v836, -inf
        %840 = vmax.xlane.f32.xlu0 %v839
        %v841 = vpop.xlane.xlu0 %840
        %v842 = vsub.f32 %v836, %v841
        %v843 = vmul.f32 %v842, 1.442695
        %v844 = vpow.pop %v843
        %v845 = vsel %vm524, %v844, 0.0
        %846 = vadd.xlane.f32.xlu0 %v845
        %v847 = vpop.xlane.xlu0 %846
        %v848 = vrcp.pop %v847
        %v849 = vmul.f32 %v844, %v848
        %850 = vrot.lane.b32.xlu0 %v505, 56
        %v851 = vpop.permute.xlu0 %850
        %v854 = vsel %vm524, %v849, 0
        %856 = vmatprep.subr.mxu0 0.0
        %857 = vmatpush1.msra.mxu0 0.0
        %858 = vmatprep.subr.mxu0 0.0
        %859 = vmatpush1.msra.mxu0 0.0
        %860 = vmatprep.subr.mxu0 0.0
        %861 = vmatpush1.msra.mxu0 0.0
        %862 = vmatprep.subr.mxu0 0.0
        %863 = vmatpush1.msra.mxu0 0.0
        %864 = vmatprep.subr.mxu0 0.0
        %865 = vmatpush1.msra.mxu0 0.0
        %866 = vmatprep.subr.mxu0 0.0
        %867 = vmatpush1.msra.mxu0 0.0
        %868 = vmatprep.subr.mxu0 0.0
        %869 = vmatpush1.msra.mxu0 0.0
        %870 = vmatprep.subr.mxu0 0.0
        %871 = vmatpush1.msra.mxu0 0.0
        %872 = vmatprep.subr.mxu0 0.0
        %873 = vmatpush1.msra.mxu0 0.0
        %874 = vmatprep.subr.mxu0 0.0
        %875 = vmatpush1.msra.mxu0 0.0
        %876 = vmatprep.subr.mxu0 0.0
        %877 = vmatpush1.msra.mxu0 0.0
        %878 = vmatprep.subr.mxu0 0.0
        %879 = vmatpush1.msra.mxu0 0.0
        %880 = vmatprep.subr.mxu0 0.0
        %881 = vmatpush1.msra.mxu0 0.0
        %882 = vmatprep.subr.mxu0 0.0
        %883 = vmatpush1.msra.mxu0 0.0
        %884 = vmatprep.subr.mxu0 0.0
        %885 = vmatpush1.msra.mxu0 0.0
        %886 = vmatprep.subr.mxu0 0.0
        %887 = vmatpush1.msra.mxu0 %v851
        %888 = vmatprep.subr.mxu0 0.0
        %889 = vmatpush2.msra.mxu0 0.0
        %890 = vmatprep.subr.mxu0 0.0
        %891 = vmatpush2.msra.mxu0 0.0
        %892 = vmatprep.subr.mxu0 0.0
        %893 = vmatpush2.msra.mxu0 0.0
        %894 = vmatprep.subr.mxu0 0.0
        %895 = vmatpush2.msra.mxu0 0.0
        %896 = vmatprep.subr.mxu0 0.0
        %897 = vmatpush2.msra.mxu0 0.0
        %898 = vmatprep.subr.mxu0 0.0
        %899 = vmatpush2.msra.mxu0 0.0
        %900 = vmatprep.subr.mxu0 0.0
        %901 = vmatpush2.msra.mxu0 0.0
        %902 = vmatprep.subr.mxu0 0.0
        %903 = vmatpush2.msra.mxu0 0.0
        %904 = vmatprep.subr.mxu0 0.0
        %905 = vmatpush2.msra.mxu0 0.0
        %906 = vmatprep.subr.mxu0 0.0
        %907 = vmatpush2.msra.mxu0 0.0
        %908 = vmatprep.subr.mxu0 0.0
        %909 = vmatpush2.msra.mxu0 0.0
        %910 = vmatprep.subr.mxu0 0.0
        %911 = vmatpush2.msra.mxu0 0.0
        %912 = vmatprep.subr.mxu0 0.0
        %913 = vmatpush2.msra.mxu0 0.0
        %914 = vmatprep.subr.mxu0 0.0
        %915 = vmatpush2.msra.mxu0 0.0
        %916 = vmatprep.subr.mxu0 0.0
        %917 = vmatpush2.msra.mxu0 0.0
        %918 = vmatprep.subr.mxu0 0.0
        %919 = vmatpush2.msra.mxu0 0.0
        %920 = vmatprep.mubr.f32.mxu0 0.0
        %921 = vmatmul.mubr.f32.gmra.mxu0 %v854
        %v922 = vpop.f32.mrf.mxu0
        %v923 = vadd.f32 0.0, %v922
        %v924 = vpop.f32.mrf.mxu0
        %925 = vdwg.mxu0
        %v927 = vsel %vm524, %v923, 0
        %929 = vmatprep.subr.mxu0 0.0
        %930 = vmatpush1.msra.mxu0 0.0
        %931 = vmatprep.subr.mxu0 0.0
        %932 = vmatpush1.msra.mxu0 0.0
        %933 = vmatprep.subr.mxu0 0.0
        %934 = vmatpush1.msra.mxu0 0.0
        %935 = vmatprep.subr.mxu0 0.0
        %936 = vmatpush1.msra.mxu0 0.0
        %937 = vmatprep.subr.mxu0 0.0
        %938 = vmatpush1.msra.mxu0 0.0
        %939 = vmatprep.subr.mxu0 0.0
        %940 = vmatpush1.msra.mxu0 0.0
        %941 = vmatprep.subr.mxu0 0.0
        %942 = vmatpush1.msra.mxu0 0.0
        %943 = vmatprep.subr.mxu0 0.0
        %944 = vmatpush1.msra.mxu0 0.0
        %945 = vmatprep.subr.mxu0 0.0
        %946 = vmatpush1.msra.mxu0 0.0
        %947 = vmatprep.subr.mxu0 0.0
        %948 = vmatpush1.msra.mxu0 0.0
        %949 = vmatprep.subr.mxu0 0.0
        %950 = vmatpush1.msra.mxu0 0.0
        %951 = vmatprep.subr.mxu0 0.0
        %952 = vmatpush1.msra.mxu0 0.0
        %953 = vmatprep.subr.mxu0 0.0
        %954 = vmatpush1.msra.mxu0 0.0
        %955 = vmatprep.subr.mxu0 0.0
        %956 = vmatpush1.msra.mxu0 0.0
        %957 = vmatprep.subr.mxu0 0.0
        %958 = vmatpush1.msra.mxu0 0.0
        %959 = vmatprep.subr.mxu0 0.0
        %960 = vmatpush1.msra.mxu0 %v509
        %961 = vmatprep.subr.mxu0 0.0
        %962 = vmatpush2.msra.mxu0 0.0
        %963 = vmatprep.subr.mxu0 0.0
        %964 = vmatpush2.msra.mxu0 0.0
        %965 = vmatprep.subr.mxu0 0.0
        %966 = vmatpush2.msra.mxu0 0.0
        %967 = vmatprep.subr.mxu0 0.0
        %968 = vmatpush2.msra.mxu0 0.0
        %969 = vmatprep.subr.mxu0 0.0
        %970 = vmatpush2.msra.mxu0 0.0
        %971 = vmatprep.subr.mxu0 0.0
        %972 = vmatpush2.msra.mxu0 0.0
        %973 = vmatprep.subr.mxu0 0.0
        %974 = vmatpush2.msra.mxu0 0.0
        %975 = vmatprep.subr.mxu0 0.0
        %976 = vmatpush2.msra.mxu0 0.0
        %977 = vmatprep.subr.mxu0 0.0
        %978 = vmatpush2.msra.mxu0 0.0
        %979 = vmatprep.subr.mxu0 0.0
        %980 = vmatpush2.msra.mxu0 0.0
        %981 = vmatprep.subr.mxu0 0.0
        %982 = vmatpush2.msra.mxu0 0.0
        %983 = vmatprep.subr.mxu0 0.0
        %984 = vmatpush2.msra.mxu0 0.0
        %985 = vmatprep.subr.mxu0 0.0
        %986 = vmatpush2.msra.mxu0 0.0
        %987 = vmatprep.subr.mxu0 0.0
        %988 = vmatpush2.msra.mxu0 0.0
        %989 = vmatprep.subr.mxu0 0.0
        %990 = vmatpush2.msra.mxu0 0.0
        %991 = vmatprep.subr.mxu0 0.0
        %992 = vmatpush2.msra.mxu0 0.0
        %993 = vmatprep.mubr.f32.mxu0 0.0
        %994 = vmatmul.mubr.f32.gmra.mxu0 %v927
        %v995 = vpop.f32.mrf.mxu0
        %v996 = vadd.f32 0.0, %v995
        %v997 = vpop.f32.mrf.mxu0
        %998 = vdwg.mxu0
        %v999 = vadd.f32 %v760, %v996
        %1000 = vrot.lane.b32.xlu0 %v520, 112
        %v1001 = vpop.permute.xlu0 %1000
        %1002 = vrot.lane.b32.xlu0 %v505, 80
        %v1003 = vpop.permute.xlu0 %1002
        %v1004 = vsel %vm524, %v1001, 0
        %v1006 = vsel %vm524, %v1003, 0
        %1008 = vmatprep.subr.mxu0 0.0
        %1009 = vmatpush1.xpose.msra.mxu0 0.0
        %1010 = vmatprep.subr.mxu0 0.0
        %1011 = vmatpush1.xpose.msra.mxu0 0.0
        %1012 = vmatprep.subr.mxu0 0.0
        %1013 = vmatpush1.xpose.msra.mxu0 0.0
        %1014 = vmatprep.subr.mxu0 0.0
        %1015 = vmatpush1.xpose.msra.mxu0 0.0
        %1016 = vmatprep.subr.mxu0 0.0
        %1017 = vmatpush1.xpose.msra.mxu0 0.0
        %1018 = vmatprep.subr.mxu0 0.0
        %1019 = vmatpush1.xpose.msra.mxu0 0.0
        %1020 = vmatprep.subr.mxu0 0.0
        %1021 = vmatpush1.xpose.msra.mxu0 0.0
        %1022 = vmatprep.subr.mxu0 0.0
        %1023 = vmatpush1.xpose.msra.mxu0 0.0
        %1024 = vmatprep.subr.mxu0 0.0
        %1025 = vmatpush1.xpose.msra.mxu0 0.0
        %1026 = vmatprep.subr.mxu0 0.0
        %1027 = vmatpush1.xpose.msra.mxu0 0.0
        %1028 = vmatprep.subr.mxu0 0.0
        %1029 = vmatpush1.xpose.msra.mxu0 0.0
        %1030 = vmatprep.subr.mxu0 0.0
        %1031 = vmatpush1.xpose.msra.mxu0 0.0
        %1032 = vmatprep.subr.mxu0 0.0
        %1033 = vmatpush1.xpose.msra.mxu0 0.0
        %1034 = vmatprep.subr.mxu0 0.0
        %1035 = vmatpush1.xpose.msra.mxu0 0.0
        %1036 = vmatprep.subr.mxu0 0.0
        %1037 = vmatpush1.xpose.msra.mxu0 0.0
        %1038 = vmatprep.subr.mxu0 0.0
        %1039 = vmatpush1.xpose.msra.mxu0 %v1006
        %1040 = vmatprep.subr.mxu0 0.0
        %1041 = vmatpush2.xpose.msra.mxu0 0.0
        %1042 = vmatprep.subr.mxu0 0.0
        %1043 = vmatpush2.xpose.msra.mxu0 0.0
        %1044 = vmatprep.subr.mxu0 0.0
        %1045 = vmatpush2.xpose.msra.mxu0 0.0
        %1046 = vmatprep.subr.mxu0 0.0
        %1047 = vmatpush2.xpose.msra.mxu0 0.0
        %1048 = vmatprep.subr.mxu0 0.0
        %1049 = vmatpush2.xpose.msra.mxu0 0.0
        %1050 = vmatprep.subr.mxu0 0.0
        %1051 = vmatpush2.xpose.msra.mxu0 0.0
        %1052 = vmatprep.subr.mxu0 0.0
        %1053 = vmatpush2.xpose.msra.mxu0 0.0
        %1054 = vmatprep.subr.mxu0 0.0
        %1055 = vmatpush2.xpose.msra.mxu0 0.0
        %1056 = vmatprep.subr.mxu0 0.0
        %1057 = vmatpush2.xpose.msra.mxu0 0.0
        %1058 = vmatprep.subr.mxu0 0.0
        %1059 = vmatpush2.xpose.msra.mxu0 0.0
        %1060 = vmatprep.subr.mxu0 0.0
        %1061 = vmatpush2.xpose.msra.mxu0 0.0
        %1062 = vmatprep.subr.mxu0 0.0
        %1063 = vmatpush2.xpose.msra.mxu0 0.0
        %1064 = vmatprep.subr.mxu0 0.0
        %1065 = vmatpush2.xpose.msra.mxu0 0.0
        %1066 = vmatprep.subr.mxu0 0.0
        %1067 = vmatpush2.xpose.msra.mxu0 0.0
        %1068 = vmatprep.subr.mxu0 0.0
        %1069 = vmatpush2.xpose.msra.mxu0 0.0
        %1070 = vmatprep.subr.mxu0 0.0
        %1071 = vmatpush2.xpose.msra.mxu0 0.0
        %1072 = vmatprep.mubr.f32.mxu0 0.0
        %1073 = vmatmul.mubr.f32.gmra.mxu0 %v1004
        %v1074 = vpop.f32.mrf.mxu0
        %v1075 = vadd.f32 0.0, %v1074
        %v1076 = vpop.f32.mrf.mxu0
        %1077 = vdwg.mxu0
        %v1078 = vsel %vm524, %v1075, -inf
        %1079 = vmax.xlane.f32.xlu0 %v1078
        %v1080 = vpop.xlane.xlu0 %1079
        %v1081 = vsub.f32 %v1075, %v1080
        %v1082 = vmul.f32 %v1081, 1.442695
        %v1083 = vpow.pop %v1082
        %v1084 = vsel %vm524, %v1083, 0.0
        %1085 = vadd.xlane.f32.xlu0 %v1084
        %v1086 = vpop.xlane.xlu0 %1085
        %v1087 = vrcp.pop %v1086
        %v1088 = vmul.f32 %v1083, %v1087
        %1089 = vrot.lane.b32.xlu0 %v505, 48
        %v1090 = vpop.permute.xlu0 %1089
        %v1093 = vsel %vm524, %v1088, 0
        %1095 = vmatprep.subr.mxu0 0.0
        %1096 = vmatpush1.msra.mxu0 0.0
        %1097 = vmatprep.subr.mxu0 0.0
        %1098 = vmatpush1.msra.mxu0 0.0
        %1099 = vmatprep.subr.mxu0 0.0
        %1100 = vmatpush1.msra.mxu0 0.0
        %1101 = vmatprep.subr.mxu0 0.0
        %1102 = vmatpush1.msra.mxu0 0.0
        %1103 = vmatprep.subr.mxu0 0.0
        %1104 = vmatpush1.msra.mxu0 0.0
        %1105 = vmatprep.subr.mxu0 0.0
        %1106 = vmatpush1.msra.mxu0 0.0
        %1107 = vmatprep.subr.mxu0 0.0
        %1108 = vmatpush1.msra.mxu0 0.0
        %1109 = vmatprep.subr.mxu0 0.0
        %1110 = vmatpush1.msra.mxu0 0.0
        %1111 = vmatprep.subr.mxu0 0.0
        %1112 = vmatpush1.msra.mxu0 0.0
        %1113 = vmatprep.subr.mxu0 0.0
        %1114 = vmatpush1.msra.mxu0 0.0
        %1115 = vmatprep.subr.mxu0 0.0
        %1116 = vmatpush1.msra.mxu0 0.0
        %1117 = vmatprep.subr.mxu0 0.0
        %1118 = vmatpush1.msra.mxu0 0.0
        %1119 = vmatprep.subr.mxu0 0.0
        %1120 = vmatpush1.msra.mxu0 0.0
        %1121 = vmatprep.subr.mxu0 0.0
        %1122 = vmatpush1.msra.mxu0 0.0
        %1123 = vmatprep.subr.mxu0 0.0
        %1124 = vmatpush1.msra.mxu0 0.0
        %1125 = vmatprep.subr.mxu0 0.0
        %1126 = vmatpush1.msra.mxu0 %v1090
        %1127 = vmatprep.subr.mxu0 0.0
        %1128 = vmatpush2.msra.mxu0 0.0
        %1129 = vmatprep.subr.mxu0 0.0
        %1130 = vmatpush2.msra.mxu0 0.0
        %1131 = vmatprep.subr.mxu0 0.0
        %1132 = vmatpush2.msra.mxu0 0.0
        %1133 = vmatprep.subr.mxu0 0.0
        %1134 = vmatpush2.msra.mxu0 0.0
        %1135 = vmatprep.subr.mxu0 0.0
        %1136 = vmatpush2.msra.mxu0 0.0
        %1137 = vmatprep.subr.mxu0 0.0
        %1138 = vmatpush2.msra.mxu0 0.0
        %1139 = vmatprep.subr.mxu0 0.0
        %1140 = vmatpush2.msra.mxu0 0.0
        %1141 = vmatprep.subr.mxu0 0.0
        %1142 = vmatpush2.msra.mxu0 0.0
        %1143 = vmatprep.subr.mxu0 0.0
        %1144 = vmatpush2.msra.mxu0 0.0
        %1145 = vmatprep.subr.mxu0 0.0
        %1146 = vmatpush2.msra.mxu0 0.0
        %1147 = vmatprep.subr.mxu0 0.0
        %1148 = vmatpush2.msra.mxu0 0.0
        %1149 = vmatprep.subr.mxu0 0.0
        %1150 = vmatpush2.msra.mxu0 0.0
        %1151 = vmatprep.subr.mxu0 0.0
        %1152 = vmatpush2.msra.mxu0 0.0
        %1153 = vmatprep.subr.mxu0 0.0
        %1154 = vmatpush2.msra.mxu0 0.0
        %1155 = vmatprep.subr.mxu0 0.0
        %1156 = vmatpush2.msra.mxu0 0.0
        %1157 = vmatprep.subr.mxu0 0.0
        %1158 = vmatpush2.msra.mxu0 0.0
        %1159 = vmatprep.mubr.f32.mxu0 0.0
        %1160 = vmatmul.mubr.f32.gmra.mxu0 %v1093
        %v1161 = vpop.f32.mrf.mxu0
        %v1162 = vadd.f32 0.0, %v1161
        %v1163 = vpop.f32.mrf.mxu0
        %1164 = vdwg.mxu0
        %v1166 = vsel %vm524, %v1162, 0
        %1168 = vmatprep.subr.mxu0 0.0
        %1169 = vmatpush1.msra.mxu0 0.0
        %1170 = vmatprep.subr.mxu0 0.0
        %1171 = vmatpush1.msra.mxu0 0.0
        %1172 = vmatprep.subr.mxu0 0.0
        %1173 = vmatpush1.msra.mxu0 0.0
        %1174 = vmatprep.subr.mxu0 0.0
        %1175 = vmatpush1.msra.mxu0 0.0
        %1176 = vmatprep.subr.mxu0 0.0
        %1177 = vmatpush1.msra.mxu0 0.0
        %1178 = vmatprep.subr.mxu0 0.0
        %1179 = vmatpush1.msra.mxu0 0.0
        %1180 = vmatprep.subr.mxu0 0.0
        %1181 = vmatpush1.msra.mxu0 0.0
        %1182 = vmatprep.subr.mxu0 0.0
        %1183 = vmatpush1.msra.mxu0 0.0
        %1184 = vmatprep.subr.mxu0 0.0
        %1185 = vmatpush1.msra.mxu0 0.0
        %1186 = vmatprep.subr.mxu0 0.0
        %1187 = vmatpush1.msra.mxu0 0.0
        %1188 = vmatprep.subr.mxu0 0.0
        %1189 = vmatpush1.msra.mxu0 0.0
        %1190 = vmatprep.subr.mxu0 0.0
        %1191 = vmatpush1.msra.mxu0 0.0
        %1192 = vmatprep.subr.mxu0 0.0
        %1193 = vmatpush1.msra.mxu0 0.0
        %1194 = vmatprep.subr.mxu0 0.0
        %1195 = vmatpush1.msra.mxu0 0.0
        %1196 = vmatprep.subr.mxu0 0.0
        %1197 = vmatpush1.msra.mxu0 0.0
        %1198 = vmatprep.subr.mxu0 0.0
        %1199 = vmatpush1.msra.mxu0 %v510
        %1200 = vmatprep.subr.mxu0 0.0
        %1201 = vmatpush2.msra.mxu0 0.0
        %1202 = vmatprep.subr.mxu0 0.0
        %1203 = vmatpush2.msra.mxu0 0.0
        %1204 = vmatprep.subr.mxu0 0.0
        %1205 = vmatpush2.msra.mxu0 0.0
        %1206 = vmatprep.subr.mxu0 0.0
        %1207 = vmatpush2.msra.mxu0 0.0
        %1208 = vmatprep.subr.mxu0 0.0
        %1209 = vmatpush2.msra.mxu0 0.0
        %1210 = vmatprep.subr.mxu0 0.0
        %1211 = vmatpush2.msra.mxu0 0.0
        %1212 = vmatprep.subr.mxu0 0.0
        %1213 = vmatpush2.msra.mxu0 0.0
        %1214 = vmatprep.subr.mxu0 0.0
        %1215 = vmatpush2.msra.mxu0 0.0
        %1216 = vmatprep.subr.mxu0 0.0
        %1217 = vmatpush2.msra.mxu0 0.0
        %1218 = vmatprep.subr.mxu0 0.0
        %1219 = vmatpush2.msra.mxu0 0.0
        %1220 = vmatprep.subr.mxu0 0.0
        %1221 = vmatpush2.msra.mxu0 0.0
        %1222 = vmatprep.subr.mxu0 0.0
        %1223 = vmatpush2.msra.mxu0 0.0
        %1224 = vmatprep.subr.mxu0 0.0
        %1225 = vmatpush2.msra.mxu0 0.0
        %1226 = vmatprep.subr.mxu0 0.0
        %1227 = vmatpush2.msra.mxu0 0.0
        %1228 = vmatprep.subr.mxu0 0.0
        %1229 = vmatpush2.msra.mxu0 0.0
        %1230 = vmatprep.subr.mxu0 0.0
        %1231 = vmatpush2.msra.mxu0 0.0
        %1232 = vmatprep.mubr.f32.mxu0 0.0
        %1233 = vmatmul.mubr.f32.gmra.mxu0 %v1166
        %v1234 = vpop.f32.mrf.mxu0
        %v1235 = vadd.f32 0.0, %v1234
        %v1236 = vpop.f32.mrf.mxu0
        %1237 = vdwg.mxu0
        %v1238 = vadd.f32 %v999, %v1235
        %1239 = vrot.lane.b32.xlu0 %v520, 104
        %v1240 = vpop.permute.xlu0 %1239
        %1241 = vrot.lane.b32.xlu0 %v505, 72
        %v1242 = vpop.permute.xlu0 %1241
        %v1243 = vsel %vm524, %v1240, 0
        %v1245 = vsel %vm524, %v1242, 0
        %1247 = vmatprep.subr.mxu0 0.0
        %1248 = vmatpush1.xpose.msra.mxu0 0.0
        %1249 = vmatprep.subr.mxu0 0.0
        %1250 = vmatpush1.xpose.msra.mxu0 0.0
        %1251 = vmatprep.subr.mxu0 0.0
        %1252 = vmatpush1.xpose.msra.mxu0 0.0
        %1253 = vmatprep.subr.mxu0 0.0
        %1254 = vmatpush1.xpose.msra.mxu0 0.0
        %1255 = vmatprep.subr.mxu0 0.0
        %1256 = vmatpush1.xpose.msra.mxu0 0.0
        %1257 = vmatprep.subr.mxu0 0.0
        %1258 = vmatpush1.xpose.msra.mxu0 0.0
        %1259 = vmatprep.subr.mxu0 0.0
        %1260 = vmatpush1.xpose.msra.mxu0 0.0
        %1261 = vmatprep.subr.mxu0 0.0
        %1262 = vmatpush1.xpose.msra.mxu0 0.0
        %1263 = vmatprep.subr.mxu0 0.0
        %1264 = vmatpush1.xpose.msra.mxu0 0.0
        %1265 = vmatprep.subr.mxu0 0.0
        %1266 = vmatpush1.xpose.msra.mxu0 0.0
        %1267 = vmatprep.subr.mxu0 0.0
        %1268 = vmatpush1.xpose.msra.mxu0 0.0
        %1269 = vmatprep.subr.mxu0 0.0
        %1270 = vmatpush1.xpose.msra.mxu0 0.0
        %1271 = vmatprep.subr.mxu0 0.0
        %1272 = vmatpush1.xpose.msra.mxu0 0.0
        %1273 = vmatprep.subr.mxu0 0.0
        %1274 = vmatpush1.xpose.msra.mxu0 0.0
        %1275 = vmatprep.subr.mxu0 0.0
        %1276 = vmatpush1.xpose.msra.mxu0 0.0
        %1277 = vmatprep.subr.mxu0 0.0
        %1278 = vmatpush1.xpose.msra.mxu0 %v1245
        %1279 = vmatprep.subr.mxu0 0.0
        %1280 = vmatpush2.xpose.msra.mxu0 0.0
        %1281 = vmatprep.subr.mxu0 0.0
        %1282 = vmatpush2.xpose.msra.mxu0 0.0
        %1283 = vmatprep.subr.mxu0 0.0
        %1284 = vmatpush2.xpose.msra.mxu0 0.0
        %1285 = vmatprep.subr.mxu0 0.0
        %1286 = vmatpush2.xpose.msra.mxu0 0.0
        %1287 = vmatprep.subr.mxu0 0.0
        %1288 = vmatpush2.xpose.msra.mxu0 0.0
        %1289 = vmatprep.subr.mxu0 0.0
        %1290 = vmatpush2.xpose.msra.mxu0 0.0
        %1291 = vmatprep.subr.mxu0 0.0
        %1292 = vmatpush2.xpose.msra.mxu0 0.0
        %1293 = vmatprep.subr.mxu0 0.0
        %1294 = vmatpush2.xpose.msra.mxu0 0.0
        %1295 = vmatprep.subr.mxu0 0.0
        %1296 = vmatpush2.xpose.msra.mxu0 0.0
        %1297 = vmatprep.subr.mxu0 0.0
        %1298 = vmatpush2.xpose.msra.mxu0 0.0
        %1299 = vmatprep.subr.mxu0 0.0
        %1300 = vmatpush2.xpose.msra.mxu0 0.0
        %1301 = vmatprep.subr.mxu0 0.0
        %1302 = vmatpush2.xpose.msra.mxu0 0.0
        %1303 = vmatprep.subr.mxu0 0.0
        %1304 = vmatpush2.xpose.msra.mxu0 0.0
        %1305 = vmatprep.subr.mxu0 0.0
        %1306 = vmatpush2.xpose.msra.mxu0 0.0
        %1307 = vmatprep.subr.mxu0 0.0
        %1308 = vmatpush2.xpose.msra.mxu0 0.0
        %1309 = vmatprep.subr.mxu0 0.0
        %1310 = vmatpush2.xpose.msra.mxu0 0.0
        %1311 = vmatprep.mubr.f32.mxu0 0.0
        %1312 = vmatmul.mubr.f32.gmra.mxu0 %v1243
        %v1313 = vpop.f32.mrf.mxu0
        %v1314 = vadd.f32 0.0, %v1313
        %v1315 = vpop.f32.mrf.mxu0
        %1316 = vdwg.mxu0
        %v1317 = vsel %vm524, %v1314, -inf
        %1318 = vmax.xlane.f32.xlu0 %v1317
        %v1319 = vpop.xlane.xlu0 %1318
        %v1320 = vsub.f32 %v1314, %v1319
        %v1321 = vmul.f32 %v1320, 1.442695
        %v1322 = vpow.pop %v1321
        %v1323 = vsel %vm524, %v1322, 0.0
        %1324 = vadd.xlane.f32.xlu0 %v1323
        %v1325 = vpop.xlane.xlu0 %1324
        %v1326 = vrcp.pop %v1325
        %v1327 = vmul.f32 %v1322, %v1326
        %1328 = vrot.lane.b32.xlu0 %v505, 40
        %v1329 = vpop.permute.xlu0 %1328
        %v1332 = vsel %vm524, %v1327, 0
        %1334 = vmatprep.subr.mxu0 0.0
        %1335 = vmatpush1.msra.mxu0 0.0
        %1336 = vmatprep.subr.mxu0 0.0
        %1337 = vmatpush1.msra.mxu0 0.0
        %1338 = vmatprep.subr.mxu0 0.0
        %1339 = vmatpush1.msra.mxu0 0.0
        %1340 = vmatprep.subr.mxu0 0.0
        %1341 = vmatpush1.msra.mxu0 0.0
        %1342 = vmatprep.subr.mxu0 0.0
        %1343 = vmatpush1.msra.mxu0 0.0
        %1344 = vmatprep.subr.mxu0 0.0
        %1345 = vmatpush1.msra.mxu0 0.0
        %1346 = vmatprep.subr.mxu0 0.0
        %1347 = vmatpush1.msra.mxu0 0.0
        %1348 = vmatprep.subr.mxu0 0.0
        %1349 = vmatpush1.msra.mxu0 0.0
        %1350 = vmatprep.subr.mxu0 0.0
        %1351 = vmatpush1.msra.mxu0 0.0
        %1352 = vmatprep.subr.mxu0 0.0
        %1353 = vmatpush1.msra.mxu0 0.0
        %1354 = vmatprep.subr.mxu0 0.0
        %1355 = vmatpush1.msra.mxu0 0.0
        %1356 = vmatprep.subr.mxu0 0.0
        %1357 = vmatpush1.msra.mxu0 0.0
        %1358 = vmatprep.subr.mxu0 0.0
        %1359 = vmatpush1.msra.mxu0 0.0
        %1360 = vmatprep.subr.mxu0 0.0
        %1361 = vmatpush1.msra.mxu0 0.0
        %1362 = vmatprep.subr.mxu0 0.0
        %1363 = vmatpush1.msra.mxu0 0.0
        %1364 = vmatprep.subr.mxu0 0.0
        %1365 = vmatpush1.msra.mxu0 %v1329
        %1366 = vmatprep.subr.mxu0 0.0
        %1367 = vmatpush2.msra.mxu0 0.0
        %1368 = vmatprep.subr.mxu0 0.0
        %1369 = vmatpush2.msra.mxu0 0.0
        %1370 = vmatprep.subr.mxu0 0.0
        %1371 = vmatpush2.msra.mxu0 0.0
        %1372 = vmatprep.subr.mxu0 0.0
        %1373 = vmatpush2.msra.mxu0 0.0
        %1374 = vmatprep.subr.mxu0 0.0
        %1375 = vmatpush2.msra.mxu0 0.0
        %1376 = vmatprep.subr.mxu0 0.0
        %1377 = vmatpush2.msra.mxu0 0.0
        %1378 = vmatprep.subr.mxu0 0.0
        %1379 = vmatpush2.msra.mxu0 0.0
        %1380 = vmatprep.subr.mxu0 0.0
        %1381 = vmatpush2.msra.mxu0 0.0
        %1382 = vmatprep.subr.mxu0 0.0
        %1383 = vmatpush2.msra.mxu0 0.0
        %1384 = vmatprep.subr.mxu0 0.0
        %1385 = vmatpush2.msra.mxu0 0.0
        %1386 = vmatprep.subr.mxu0 0.0
        %1387 = vmatpush2.msra.mxu0 0.0
        %1388 = vmatprep.subr.mxu0 0.0
        %1389 = vmatpush2.msra.mxu0 0.0
        %1390 = vmatprep.subr.mxu0 0.0
        %1391 = vmatpush2.msra.mxu0 0.0
        %1392 = vmatprep.subr.mxu0 0.0
        %1393 = vmatpush2.msra.mxu0 0.0
        %1394 = vmatprep.subr.mxu0 0.0
        %1395 = vmatpush2.msra.mxu0 0.0
        %1396 = vmatprep.subr.mxu0 0.0
        %1397 = vmatpush2.msra.mxu0 0.0
        %1398 = vmatprep.mubr.f32.mxu0 0.0
        %1399 = vmatmul.mubr.f32.gmra.mxu0 %v1332
        %v1400 = vpop.f32.mrf.mxu0
        %v1401 = vadd.f32 0.0, %v1400
        %v1402 = vpop.f32.mrf.mxu0
        %1403 = vdwg.mxu0
        %v1405 = vsel %vm524, %v1401, 0
        %1407 = vmatprep.subr.mxu0 0.0
        %1408 = vmatpush1.msra.mxu0 0.0
        %1409 = vmatprep.subr.mxu0 0.0
        %1410 = vmatpush1.msra.mxu0 0.0
        %1411 = vmatprep.subr.mxu0 0.0
        %1412 = vmatpush1.msra.mxu0 0.0
        %1413 = vmatprep.subr.mxu0 0.0
        %1414 = vmatpush1.msra.mxu0 0.0
        %1415 = vmatprep.subr.mxu0 0.0
        %1416 = vmatpush1.msra.mxu0 0.0
        %1417 = vmatprep.subr.mxu0 0.0
        %1418 = vmatpush1.msra.mxu0 0.0
        %1419 = vmatprep.subr.mxu0 0.0
        %1420 = vmatpush1.msra.mxu0 0.0
        %1421 = vmatprep.subr.mxu0 0.0
        %1422 = vmatpush1.msra.mxu0 0.0
        %1423 = vmatprep.subr.mxu0 0.0
        %1424 = vmatpush1.msra.mxu0 0.0
        %1425 = vmatprep.subr.mxu0 0.0
        %1426 = vmatpush1.msra.mxu0 0.0
        %1427 = vmatprep.subr.mxu0 0.0
        %1428 = vmatpush1.msra.mxu0 0.0
        %1429 = vmatprep.subr.mxu0 0.0
        %1430 = vmatpush1.msra.mxu0 0.0
        %1431 = vmatprep.subr.mxu0 0.0
        %1432 = vmatpush1.msra.mxu0 0.0
        %1433 = vmatprep.subr.mxu0 0.0
        %1434 = vmatpush1.msra.mxu0 0.0
        %1435 = vmatprep.subr.mxu0 0.0
        %1436 = vmatpush1.msra.mxu0 0.0
        %1437 = vmatprep.subr.mxu0 0.0
        %1438 = vmatpush1.msra.mxu0 %v511
        %1439 = vmatprep.subr.mxu0 0.0
        %1440 = vmatpush2.msra.mxu0 0.0
        %1441 = vmatprep.subr.mxu0 0.0
        %1442 = vmatpush2.msra.mxu0 0.0
        %1443 = vmatprep.subr.mxu0 0.0
        %1444 = vmatpush2.msra.mxu0 0.0
        %1445 = vmatprep.subr.mxu0 0.0
        %1446 = vmatpush2.msra.mxu0 0.0
        %1447 = vmatprep.subr.mxu0 0.0
        %1448 = vmatpush2.msra.mxu0 0.0
        %1449 = vmatprep.subr.mxu0 0.0
        %1450 = vmatpush2.msra.mxu0 0.0
        %1451 = vmatprep.subr.mxu0 0.0
        %1452 = vmatpush2.msra.mxu0 0.0
        %1453 = vmatprep.subr.mxu0 0.0
        %1454 = vmatpush2.msra.mxu0 0.0
        %1455 = vmatprep.subr.mxu0 0.0
        %1456 = vmatpush2.msra.mxu0 0.0
        %1457 = vmatprep.subr.mxu0 0.0
        %1458 = vmatpush2.msra.mxu0 0.0
        %1459 = vmatprep.subr.mxu0 0.0
        %1460 = vmatpush2.msra.mxu0 0.0
        %1461 = vmatprep.subr.mxu0 0.0
        %1462 = vmatpush2.msra.mxu0 0.0
        %1463 = vmatprep.subr.mxu0 0.0
        %1464 = vmatpush2.msra.mxu0 0.0
        %1465 = vmatprep.subr.mxu0 0.0
        %1466 = vmatpush2.msra.mxu0 0.0
        %1467 = vmatprep.subr.mxu0 0.0
        %1468 = vmatpush2.msra.mxu0 0.0
        %1469 = vmatprep.subr.mxu0 0.0
        %1470 = vmatpush2.msra.mxu0 0.0
        %1471 = vmatprep.mubr.f32.mxu0 0.0
        %1472 = vmatmul.mubr.f32.gmra.mxu0 %v1405
        %v1473 = vpop.f32.mrf.mxu0
        %v1474 = vadd.f32 0.0, %v1473
        %v1475 = vpop.f32.mrf.mxu0
        %1476 = vdwg.mxu0
        %v1477 = vadd.f32 %v1238, %v1474
        %v1478 = vld [vmem:[%s4] sm:$0xff]
        %v1479 = vld [vmem:[%s4 + $0x8] sm:$0xff]
        %v1480 = vld [vmem:[%s4 + $0x10] sm:$0xff]
        %v1481 = vld [vmem:[%s4 + $0x18] sm:$0xff]
        %v1482 = vld [vmem:[%s5] sm:$0x1]
        %v1484 = vlaneseq
        %v1485 = vshrl.u32 %v1484, 7
        %v1486 = vsub.s32 0, %v1485
        %v1487 = vrot.slane %v1482, %v1486
        %v1490 = vsel %vm434, %v1477, 0
        %1492 = vmatprep.subr.mxu0 0.0
        %1493 = vmatpush1.msra.mxu0 0.0
        %1494 = vmatprep.subr.mxu0 0.0
        %1495 = vmatpush1.msra.mxu0 0.0
        %1496 = vmatprep.subr.mxu0 0.0
        %1497 = vmatpush1.msra.mxu0 0.0
        %1498 = vmatprep.subr.mxu0 0.0
        %1499 = vmatpush1.msra.mxu0 0.0
        %1500 = vmatprep.subr.mxu0 0.0
        %1501 = vmatpush1.msra.mxu0 0.0
        %1502 = vmatprep.subr.mxu0 0.0
        %1503 = vmatpush1.msra.mxu0 0.0
        %1504 = vmatprep.subr.mxu0 0.0
        %1505 = vmatpush1.msra.mxu0 0.0
        %1506 = vmatprep.subr.mxu0 0.0
        %1507 = vmatpush1.msra.mxu0 0.0
        %1508 = vmatprep.subr.mxu0 0.0
        %1509 = vmatpush1.msra.mxu0 0.0
        %1510 = vmatprep.subr.mxu0 0.0
        %1511 = vmatpush1.msra.mxu0 0.0
        %1512 = vmatprep.subr.mxu0 0.0
        %1513 = vmatpush1.msra.mxu0 0.0
        %1514 = vmatprep.subr.mxu0 0.0
        %1515 = vmatpush1.msra.mxu0 0.0
        %1516 = vmatprep.subr.mxu0 0.0
        %1517 = vmatpush1.msra.mxu0 %v1481
        %1518 = vmatprep.subr.mxu0 0.0
        %1519 = vmatpush1.msra.mxu0 %v1480
        %1520 = vmatprep.subr.mxu0 0.0
        %1521 = vmatpush1.msra.mxu0 %v1479
        %1522 = vmatprep.subr.mxu0 0.0
        %1523 = vmatpush1.msra.mxu0 %v1478
        %1524 = vmatprep.subr.mxu0 0.0
        %1525 = vmatpush2.msra.mxu0 0.0
        %1526 = vmatprep.subr.mxu0 0.0
        %1527 = vmatpush2.msra.mxu0 0.0
        %1528 = vmatprep.subr.mxu0 0.0
        %1529 = vmatpush2.msra.mxu0 0.0
        %1530 = vmatprep.subr.mxu0 0.0
        %1531 = vmatpush2.msra.mxu0 0.0
        %1532 = vmatprep.subr.mxu0 0.0
        %1533 = vmatpush2.msra.mxu0 0.0
        %1534 = vmatprep.subr.mxu0 0.0
        %1535 = vmatpush2.msra.mxu0 0.0
        %1536 = vmatprep.subr.mxu0 0.0
        %1537 = vmatpush2.msra.mxu0 0.0
        %1538 = vmatprep.subr.mxu0 0.0
        %1539 = vmatpush2.msra.mxu0 0.0
        %1540 = vmatprep.subr.mxu0 0.0
        %1541 = vmatpush2.msra.mxu0 0.0
        %1542 = vmatprep.subr.mxu0 0.0
        %1543 = vmatpush2.msra.mxu0 0.0
        %1544 = vmatprep.subr.mxu0 0.0
        %1545 = vmatpush2.msra.mxu0 0.0
        %1546 = vmatprep.subr.mxu0 0.0
        %1547 = vmatpush2.msra.mxu0 0.0
        %1548 = vmatprep.subr.mxu0 0.0
        %1549 = vmatpush2.msra.mxu0 0.0
        %1550 = vmatprep.subr.mxu0 0.0
        %1551 = vmatpush2.msra.mxu0 0.0
        %1552 = vmatprep.subr.mxu0 0.0
        %1553 = vmatpush2.msra.mxu0 0.0
        %1554 = vmatprep.subr.mxu0 0.0
        %1555 = vmatpush2.msra.mxu0 0.0
        %1556 = vmatprep.mubr.f32.mxu0 0.0
        %1557 = vmatmul.mubr.f32.gmra.mxu0 %v1490
        %v1558 = vpop.f32.mrf.mxu0
        %v1559 = vadd.f32 %v1487, %v1558
        %v1560 = vpop.f32.mrf.mxu0
        %1561 = vdwg.mxu0
        %v1562 = vmul.f32 %v1559, 0.5
        %v1563 = vmul.f32 %v1559, 0.70710677
        %vm1564 = vcmp.ge.f32.partialorder %v1563, 0.0
        %v1565 = vsel %vm1564, 1.0, -1.0
        %v1566 = vand.u32 2147483647, %v1563
        %v1567 = vmul.f32 %v1566, 0.3275911
        %v1568 = vadd.f32 %v1567, 1.0
        %v1569 = vrcp.pop %v1568
        %v1570 = vmul.f32 1.0, %v1569
        %v1571 = vmul.f32 %v1570, 1.0614054
        %v1572 = vadd.f32 %v1571, -1.4531521
        %v1573 = vmul.f32 %v1572, %v1570
        %v1574 = vadd.f32 %v1573, 1.4214138
        %v1575 = vmul.f32 %v1574, %v1570
        %v1576 = vadd.f32 %v1575, -0.28449672
        %v1577 = vmul.f32 %v1576, %v1570
        %v1578 = vadd.f32 %v1577, 0.2548296
        %v1579 = vmul.f32 %v1578, %v1570
        %v1580 = vsub.f32 0.0, %v1566
        %v1581 = vmul.f32 %v1580, %v1566
        %v1582 = vmul.f32 %v1581, 1.442695
        %v1583 = vpow.pop %v1582
        %v1584 = vmul.f32 %v1579, %v1583
        %v1585 = vsub.f32 1.0, %v1584
        %v1586 = vmul.f32 %v1565, %v1585
        %v1587 = vadd.f32 %v1586, 1.0
        %v1588 = vmul.f32 %v1562, %v1587
        %v1589 = vld [vmem:[%s6] sm:$0xff]
        %v1590 = vld [vmem:[%s6 + $0x8] sm:$0xff]
        %v1591 = vld [vmem:[%s6 + $0x10] sm:$0xff]
        %v1592 = vld [vmem:[%s6 + $0x18] sm:$0xff]
        %v1593 = vld [vmem:[%s6 + $0x20] sm:$0xff]
        %v1594 = vld [vmem:[%s6 + $0x28] sm:$0xff]
        %v1595 = vld [vmem:[%s6 + $0x30] sm:$0xff]
        %v1596 = vld [vmem:[%s6 + $0x38] sm:$0xff]
        %v1597 = vld [vmem:[%s7] sm:$0x1]
        %v1599 = vlaneseq
        %v1600 = vshrl.u32 %v1599, 7
        %v1601 = vsub.s32 0, %v1600
        %v1602 = vrot.slane %v1597, %v1601
        %vm1604 = vcmask 523264
        %v1606 = vsel %vm1604, %v1588, 0
        %1608 = vmatprep.subr.mxu0 0.0
        %1609 = vmatpush1.msra.mxu0 0.0
        %1610 = vmatprep.subr.mxu0 0.0
        %1611 = vmatpush1.msra.mxu0 0.0
        %1612 = vmatprep.subr.mxu0 0.0
        %1613 = vmatpush1.msra.mxu0 0.0
        %1614 = vmatprep.subr.mxu0 0.0
        %1615 = vmatpush1.msra.mxu0 0.0
        %1616 = vmatprep.subr.mxu0 0.0
        %1617 = vmatpush1.msra.mxu0 0.0
        %1618 = vmatprep.subr.mxu0 0.0
        %1619 = vmatpush1.msra.mxu0 0.0
        %1620 = vmatprep.subr.mxu0 0.0
        %1621 = vmatpush1.msra.mxu0 0.0
        %1622 = vmatprep.subr.mxu0 0.0
        %1623 = vmatpush1.msra.mxu0 0.0
        %1624 = vmatprep.subr.mxu0 0.0
        %1625 = vmatpush1.msra.mxu0 %v1596
        %1626 = vmatprep.subr.mxu0 0.0
        %1627 = vmatpush1.msra.mxu0 %v1595
        %1628 = vmatprep.subr.mxu0 0.0
        %1629 = vmatpush1.msra.mxu0 %v1594
        %1630 = vmatprep.subr.mxu0 0.0
        %1631 = vmatpush1.msra.mxu0 %v1593
        %1632 = vmatprep.subr.mxu0 0.0
        %1633 = vmatpush1.msra.mxu0 %v1592
        %1634 = vmatprep.subr.mxu0 0.0
        %1635 = vmatpush1.msra.mxu0 %v1591
        %1636 = vmatprep.subr.mxu0 0.0
        %1637 = vmatpush1.msra.mxu0 %v1590
        %1638 = vmatprep.subr.mxu0 0.0
        %1639 = vmatpush1.msra.mxu0 %v1589
        %1640 = vmatprep.subr.mxu0 0.0
        %1641 = vmatpush2.msra.mxu0 0.0
        %1642 = vmatprep.subr.mxu0 0.0
        %1643 = vmatpush2.msra.mxu0 0.0
        %1644 = vmatprep.subr.mxu0 0.0
        %1645 = vmatpush2.msra.mxu0 0.0
        %1646 = vmatprep.subr.mxu0 0.0
        %1647 = vmatpush2.msra.mxu0 0.0
        %1648 = vmatprep.subr.mxu0 0.0
        %1649 = vmatpush2.msra.mxu0 0.0
        %1650 = vmatprep.subr.mxu0 0.0
        %1651 = vmatpush2.msra.mxu0 0.0
        %1652 = vmatprep.subr.mxu0 0.0
        %1653 = vmatpush2.msra.mxu0 0.0
        %1654 = vmatprep.subr.mxu0 0.0
        %1655 = vmatpush2.msra.mxu0 0.0
        %1656 = vmatprep.subr.mxu0 0.0
        %1657 = vmatpush2.msra.mxu0 0.0
        %1658 = vmatprep.subr.mxu0 0.0
        %1659 = vmatpush2.msra.mxu0 0.0
        %1660 = vmatprep.subr.mxu0 0.0
        %1661 = vmatpush2.msra.mxu0 0.0
        %1662 = vmatprep.subr.mxu0 0.0
        %1663 = vmatpush2.msra.mxu0 0.0
        %1664 = vmatprep.subr.mxu0 0.0
        %1665 = vmatpush2.msra.mxu0 0.0
        %1666 = vmatprep.subr.mxu0 0.0
        %1667 = vmatpush2.msra.mxu0 0.0
        %1668 = vmatprep.subr.mxu0 0.0
        %1669 = vmatpush2.msra.mxu0 0.0
        %1670 = vmatprep.subr.mxu0 0.0
        %1671 = vmatpush2.msra.mxu0 0.0
        %1672 = vmatprep.mubr.f32.mxu0 0.0
        %1673 = vmatmul.mubr.f32.gmra.mxu0 %v1606
        %v1674 = vpop.f32.mrf.mxu0
        %v1675 = vadd.f32 %v1602, %v1674
        %v1676 = vpop.f32.mrf.mxu0
        %1677 = vdwg.mxu0
        %v1678 = vadd.f32 %v1477, %v1675
        %1679 = vst.msk [vmem:[%s428] sm:$0xff] %vm434, %v1678
        %s1680 = sand.u32 %s294, 1
        %s1681 = scalar_lea.sflag [#allocation4], %s1680
        %s1682 = sand.u32 %s294, 1
        %s1683 = smul.addr %s1682, 8
        %s1684 = scalar_lea.vmem [#allocation5], %s1683
        // Predicated region
        $region73: #{tpu_custom_call.1} parent=67 // pred_check
          %p1685 = pneg %p304
        $region74: #{tpu_custom_call.1} parent=67 // pred_check_branch
          %1687 = sbr.rel (%p1685) target = $region76
        $region75: #{tpu_custom_call.1} parent=67 // pred_region
          %s1689 = ssub.s32 128, 128
          %1690 = vsyncadd %s1681, %s1689
          %s1691 = smul.addr %s29, 128
          %s1692 = scalar_lea.hbm %s12, %s1691
          %s1694 = sshll.u32 %s1684, 4
          %s1695 = int_to_ptr.vmem [resolvable:$true] %s1694
          %1697 = dma.vmem_to_hbm [thread:$0]  %s1695, 128, %s1692, %s1681
        $region76: #{tpu_custom_call.1} parent=67 // pred_fallthru
          _
      $region68: #{tpu_custom_call.1} parent=5 // pred_fallthru
        _
      %p1698 = scmp.le.s32.totalorder 2, %s24
      // Predicated region
      $region77: #{tpu_custom_call.1} parent=5 // pred_check
        %p1699 = pneg %p1698
      $region78: #{tpu_custom_call.1} parent=5 // pred_check_branch
        %1701 = sbr.rel (%p1699) target = $region80
      $region79: #{tpu_custom_call.1} parent=5 // pred_region
        %s1702 = ssub.s32 %s24, 2
        // Predicated region
        $region81: #{tpu_custom_call.1} parent=79 // pred_check
          %p1703 = pneg %p310
        $region82: #{tpu_custom_call.1} parent=79 // pred_check_branch
          %1705 = sbr.rel (%p1703) target = $region84
        $region83: #{tpu_custom_call.1} parent=79 // pred_region
          %s1706 = sand.u32 %s295, 1
          %s1707 = scalar_lea.sflag [#allocation4], %s1706
          %s1708 = sand.u32 %s295, 1
          %s1709 = smul.addr %s1708, 8
          %s1710 = scalar_lea.vmem [#allocation5], %s1709
          %1711 = dma.done %s1707, 128
        $region84: #{tpu_custom_call.1} parent=79 // pred_fallthru
          _
      $region80: #{tpu_custom_call.1} parent=5 // pred_fallthru
        _
    $region6: #{tpu_custom_call.1} parent=1 // loop_footer
      %s28 = sadd.s32 1, %s24
    $region7: #{tpu_custom_call.1} parent=1 // loop_footer_branch
      %23 = sbr.rel target = $region3
    $region8: #{tpu_custom_call.1} parent=1 // loop_exit
      _
    %1712 = vsyncpa [#allocation3], 1
    %s1713 = scalar_lea.sflag [#allocation3], 1
    %1714 = vsyncpa %s1713, 1
    %1715 = vsyncpa [#allocation4], 1
    %s1716 = scalar_lea.sflag [#allocation4], 1
    %1717 = vsyncpa %s1716, 1

</llo_original>
